<compile_context>
chip_gen: v6e
topology: v6e:2x2x1
jax: 0.10.0
libtpu: 0.0.40
codegen_flags: <defaults>
</compile_context>

<pallas_src>
import math

import jax
import jax.numpy as jnp
from jax.experimental import pallas as pl
from jax.experimental.pallas import tpu as pltpu

BN_EPS = 1e-5


def make_actor_kernel(num_batches, bn_batch):
    """Kernel closure; num_batches/bn_batch are compile-time constants."""
    inv_n = 1.0 / float(bn_batch)

    def actor_kernel(state_ref, w1t_ref, gamma_ref, beta_ref,
                     w2t_ref, b2_ref, w3t_ref, b3_ref, out_ref):
        # ---- fc1 (f32; bias omitted: exactly cancelled by BN mean subtraction) ----
        h1 = jnp.dot(state_ref[...], w1t_ref[...],
                     preferred_element_type=jnp.float32)          # (R, 512) f32

        # ---- BatchNorm1d (training mode) per bn_batch-row chunk, one-pass stats ----
        f1p = h1.shape[-1]
        h1b = h1.reshape(num_batches, bn_batch, f1p)               # sublane-clean split
        s1 = jnp.sum(h1b, axis=1, keepdims=True)
        s2 = jnp.sum(h1b * h1b, axis=1, keepdims=True)
        mean = s1 * inv_n
        var = jnp.maximum(s2 * inv_n - mean * mean, 0.0)           # biased batch var, f32
        h1b = (h1b - mean) * jax.lax.rsqrt(var + BN_EPS)
        h1 = h1b.reshape(num_batches * bn_batch, f1p)
        h1 = h1 * gamma_ref[...] + beta_ref[...]

        # ---- ReLU ----
        h1 = jnp.maximum(h1, 0.0)

        # ---- fc2 + ReLU (bf16 weights, f32 accumulation) ----
        h2 = jnp.dot(h1.astype(jnp.bfloat16), w2t_ref[...],
                     preferred_element_type=jnp.float32) + b2_ref[...]
        h2 = jnp.maximum(h2, 0.0)

        # ---- fc3 + tanh (f32; output lane-padded to 128 columns) ----
        h3 = jnp.dot(h2, w3t_ref[...],
                     preferred_element_type=jnp.float32) + b3_ref[...]
        out_ref[...] = jnp.tanh(h3)

    return actor_kernel


def actor_forward(state, params, action_size, bn_batch=None):
    """state: (num_batches * bn_batch, state_size). Each consecutive bn_batch-row
    chunk is one independent BatchNorm batch (== one PyTorch forward call)."""
    w1t, gamma, beta, w2t, b2, w3t, b3 = params
    total_rows, state_size = state.shape
    if bn_batch is None:
        bn_batch = total_rows
    assert total_rows % bn_batch == 0, "rows must be a multiple of the BN batch"
    num_batches = total_rows // bn_batch

    f1p = w1t.shape[1]
    f2p = w2t.shape[1]
    a_pad = w3t.shape[1]                      # lane-padded action width (>= action_size)

    def whole(shape):
        # Whole-array block; single grid step -> every operand DMA'd exactly once.
        return pl.BlockSpec(shape, lambda i, _s=shape: tuple(0 for _ in _s))

    in_specs = [
        whole(state.shape),
        whole(w1t.shape), whole(gamma.shape), whole(beta.shape),
        whole(w2t.shape), whole(b2.shape),
        whole(w3t.shape), whole(b3.shape),
    ]
    out_spec = whole((total_rows, a_pad))

    flops = 2 * total_rows * (state_size * f1p + f1p * f2p + f2p * a_pad)
    transcendentals = total_rows * a_pad + num_batches * f1p       # tanh + rsqrt
    bytes_accessed = int(
        sum(int(a.size) * a.dtype.itemsize for a in (state,) + tuple(params))
        + total_rows * a_pad * 4
    )

    out_padded = pl.pallas_call(
        make_actor_kernel(num_batches, bn_batch),
        out_shape=jax.ShapeDtypeStruct((total_rows, a_pad), jnp.float32),
        grid=(1,),
        in_specs=in_specs,
        out_specs=out_spec,
        compiler_params=pltpu.CompilerParams(
            vmem_limit_bytes=4 << 20,          # working set < 2 MiB incl. double buffers
        ),
        cost_estimate=pl.CostEstimate(
            flops=flops,
            transcendentals=transcendentals,
            bytes_accessed=bytes_accessed,
        ),
    )(state, *params)

    # Lane-dense kernel output; slice back to the true action width.
    return out_padded[:, :action_size]


def _round_up(x, m):
    return ((x + m - 1) // m) * m


def init_actor_params(key, state_size, action_size, fc1_units=400, fc2_units=300):
    """Init mimicking Actor.reset_weights() / nn.Linear defaults.

    Hidden dims are zero-padded to lane multiples (400->512, 300->384) and the
    fc3 output is padded to 128 lanes; padded features/columns are exact zeros
    through the whole network, so the sliced outputs are unchanged.
    w2t is stored in bf16 (HBM-traffic dominant); w1t and fc3 weight stay f32.
    """
    f1p = _round_up(fc1_units, 128)        # 512
    f2p = _round_up(fc2_units, 128)        # 384 (kept; do NOT pad to 512)
    a_pad = _round_up(action_size, 128)    # 128

    k1, k2, k3, k5, k6 = jax.random.split(key, 5)

    # hidden_init uses weight.size()[0] == out_features (quirk of the reference code)
    lim1 = 1.0 / math.sqrt(fc1_units)
    lim2 = 1.0 / math.sqrt(fc2_units)

    # weights stored transposed: (in, out)
    w1t = jax.random.uniform(k1, (state_size, fc1_units), jnp.float32, -lim1, lim1)
    w2t = jax.random.uniform(k2, (fc1_units, fc2_units), jnp.float32, -lim2, lim2)
    w3t = jax.random.uniform(k3, (fc2_units, action_size), jnp.float32, -0.003, 0.003)

    w1t = jnp.pad(w1t, ((0, 0), (0, f1p - fc1_units)))
    w2t = jnp.pad(w2t, ((0, f1p - fc1_units), (0, f2p - fc2_units)))
    w3t = jnp.pad(w3t, ((0, f2p - fc2_units), (0, a_pad - action_size)))

    # fc1 bias is dropped: it is cancelled exactly by the BatchNorm mean subtraction.
    bl2 = 1.0 / math.sqrt(fc1_units)
    bl3 = 1.0 / math.sqrt(fc2_units)
    b2 = jax.random.uniform(k5, (1, fc2_units), jnp.float32, -bl2, bl2)
    b3 = jax.random.uniform(k6, (1, action_size), jnp.float32, -bl3, bl3)
    b2 = jnp.pad(b2, ((0, 0), (0, f2p - fc2_units)))
    b3 = jnp.pad(b3, ((0, 0), (0, a_pad - action_size)))

    # BatchNorm1d affine params: gamma=1, beta=0 (padded tails must stay exactly 0)
    gamma = jnp.ones((1, f1p), jnp.float32)
    beta = jnp.zeros((1, f1p), jnp.float32)

    w2t = w2t.astype(jnp.bfloat16)

    return (w1t, gamma, beta, w2t, b2, w3t, b3)


def actor_reference(state, params, action_size, bn_batch=None):
    """Pure-JAX reference (two-pass centered BN variance) mirroring the kernel
    arithmetic per BN chunk; validates the one-pass variance used in-kernel."""
    w1t, gamma, beta, w2t, b2, w3t, b3 = params
    if bn_batch is None:
        bn_batch = state.shape[0]
    outs = []
    for s in range(0, state.shape[0], bn_batch):
        x = state[s:s + bn_batch]
        h1 = jnp.dot(x, w1t, preferred_element_type=jnp.float32)
        mean = jnp.mean(h1, axis=0, keepdims=True)
        var = jnp.mean((h1 - mean) ** 2, axis=0, keepdims=True)
        h1 = (h1 - mean) * jax.lax.rsqrt(var + BN_EPS) * gamma + beta
        h1 = jnp.maximum(h1, 0.0)
        h2 = jnp.dot(h1.astype(jnp.bfloat16), w2t,
                     preferred_element_type=jnp.float32) + b2
        h2 = jnp.maximum(h2, 0.0)
        outs.append(jnp.tanh(jnp.dot(h2, w3t, preferred_element_type=jnp.float32) + b3))
    return jnp.concatenate(outs, axis=0)[:, :action_size]


if __name__ == "__main__":
    bn_batch = 16          # one PyTorch forward() BN batch
    num_batches = 4        # independent BN batches stacked along M in one call
    state_size = 32
    action_size = 4

    key = jax.random.PRNGKey(0)
    pkey, skey = jax.random.split(key)
    params = init_actor_params(pkey, state_size, action_size)
    state = jax.random.normal(skey, (num_batches * bn_batch, state_size), jnp.float32)

    out = actor_forward(state, params, action_size, bn_batch=bn_batch)
    out = jax.block_until_ready(out)

    ref = actor_reference(state, params, action_size, bn_batch=bn_batch)
    assert out.shape == (num_batches * bn_batch, action_size)
    assert jnp.allclose(out, ref, atol=1e-3, rtol=1e-3), "mismatch vs reference"

    print("KERNEL_OK")
</pallas_src>

<mosaic_0001>
module attributes {stable_mosaic.version = 11 : i64} {
  func.func @actor_kernel(%arg0: i32, %arg1: memref<64x32xf32, #tpu.memory_space<vmem>>, %arg2: memref<32x512xf32, #tpu.memory_space<vmem>>, %arg3: memref<1x512xf32, #tpu.memory_space<vmem>>, %arg4: memref<1x512xf32, #tpu.memory_space<vmem>>, %arg5: memref<512x384xbf16, #tpu.memory_space<vmem>>, %arg6: memref<1x384xf32, #tpu.memory_space<vmem>>, %arg7: memref<384x128xf32, #tpu.memory_space<vmem>>, %arg8: memref<1x128xf32, #tpu.memory_space<vmem>>, %arg9: memref<64x128xf32, #tpu.memory_space<vmem>>) attributes {dimension_semantics = [#tpu.dimension_semantics<arbitrary>], iteration_bounds = array<i64: 1>, scalar_prefetch = 0 : i64, scratch_operands = 0 : i64, tpu.core_type = #tpu.core_type<tc>, window_params = [{pipeline_mode = #tpu.pipeline_mode<synchronous>, transform_indices = @transform_0, window_bounds = array<i64: 64, 32>}, {pipeline_mode = #tpu.pipeline_mode<synchronous>, transform_indices = @transform_1, window_bounds = array<i64: 32, 512>}, {pipeline_mode = #tpu.pipeline_mode<synchronous>, transform_indices = @transform_2, window_bounds = array<i64: 1, 512>}, {pipeline_mode = #tpu.pipeline_mode<synchronous>, transform_indices = @transform_3, window_bounds = array<i64: 1, 512>}, {pipeline_mode = #tpu.pipeline_mode<synchronous>, transform_indices = @transform_4, window_bounds = array<i64: 512, 384>}, {pipeline_mode = #tpu.pipeline_mode<synchronous>, transform_indices = @transform_5, window_bounds = array<i64: 1, 384>}, {pipeline_mode = #tpu.pipeline_mode<synchronous>, transform_indices = @transform_6, window_bounds = array<i64: 384, 128>}, {pipeline_mode = #tpu.pipeline_mode<synchronous>, transform_indices = @transform_7, window_bounds = array<i64: 1, 128>}, {pipeline_mode = #tpu.pipeline_mode<synchronous>, transform_indices = @transform_8, window_bounds = array<i64: 64, 128>}]} {
    %c0 = arith.constant 0 : index
    %c0_0 = arith.constant 0 : index
    %0 = vector.load %arg1[%c0, %c0_0] : memref<64x32xf32, #tpu.memory_space<vmem>>, vector<64x32xf32>
    %c0_1 = arith.constant 0 : index
    %c0_2 = arith.constant 0 : index
    %1 = vector.load %arg2[%c0_1, %c0_2] : memref<32x512xf32, #tpu.memory_space<vmem>>, vector<32x512xf32>
    %cst = arith.constant dense<0.000000e+00> : vector<64x512xf32>
    %2 = tpu.matmul %0, %1, %cst {dimension_numbers = #tpu.dot_dimension_numbers<[1], [0], [0], [1], [0, 0, 1, 1], [], []>} : vector<64x32xf32>, vector<32x512xf32>, vector<64x512xf32> -> vector<64x512xf32>
    %3 = vector.shape_cast %2 : vector<64x512xf32> to vector<4x16x512xf32>
    %cst_3 = arith.constant dense<0.000000e+00> : vector<4x512xf32>
    %4 = vector.multi_reduction <add>, %3, %cst_3 [1] : vector<4x16x512xf32> to vector<4x512xf32>
    %5 = vector.shape_cast %4 : vector<4x512xf32> to vector<4x1x512xf32>
    %6 = arith.mulf %3, %3 : vector<4x16x512xf32>
    %cst_4 = arith.constant dense<0.000000e+00> : vector<4x512xf32>
    %7 = vector.multi_reduction <add>, %6, %cst_4 [1] : vector<4x16x512xf32> to vector<4x512xf32>
    %8 = vector.shape_cast %7 : vector<4x512xf32> to vector<4x1x512xf32>
    %cst_5 = arith.constant 6.250000e-02 : f32
    %9 = vector.broadcast %cst_5 : f32 to vector<4x1x512xf32>
    %10 = arith.mulf %5, %9 : vector<4x1x512xf32>
    %cst_6 = arith.constant 6.250000e-02 : f32
    %11 = vector.broadcast %cst_6 : f32 to vector<4x1x512xf32>
    %12 = arith.mulf %8, %11 : vector<4x1x512xf32>
    %13 = arith.mulf %10, %10 : vector<4x1x512xf32>
    %14 = arith.subf %12, %13 : vector<4x1x512xf32>
    %cst_7 = arith.constant 0.000000e+00 : f32
    %15 = vector.broadcast %cst_7 : f32 to vector<4x1x512xf32>
    %16 = arith.maximumf %14, %15 : vector<4x1x512xf32>
    %17 = vector.broadcast %10 : vector<4x1x512xf32> to vector<4x16x512xf32>
    %18 = arith.subf %3, %17 : vector<4x16x512xf32>
    %cst_8 = arith.constant 9.99999974E-6 : f32
    %19 = vector.broadcast %cst_8 : f32 to vector<4x1x512xf32>
    %20 = arith.addf %16, %19 : vector<4x1x512xf32>
    %21 = math.rsqrt %20 : vector<4x1x512xf32>
    %22 = vector.broadcast %21 : vector<4x1x512xf32> to vector<4x16x512xf32>
    %23 = arith.mulf %18, %22 : vector<4x16x512xf32>
    %24 = vector.shape_cast %23 : vector<4x16x512xf32> to vector<64x512xf32>
    %c0_9 = arith.constant 0 : index
    %c0_10 = arith.constant 0 : index
    %25 = vector.load %arg3[%c0_9, %c0_10] : memref<1x512xf32, #tpu.memory_space<vmem>>, vector<1x512xf32>
    %26 = vector.broadcast %25 : vector<1x512xf32> to vector<64x512xf32>
    %27 = arith.mulf %24, %26 : vector<64x512xf32>
    %c0_11 = arith.constant 0 : index
    %c0_12 = arith.constant 0 : index
    %28 = vector.load %arg4[%c0_11, %c0_12] : memref<1x512xf32, #tpu.memory_space<vmem>>, vector<1x512xf32>
    %29 = vector.broadcast %28 : vector<1x512xf32> to vector<64x512xf32>
    %30 = arith.addf %27, %29 : vector<64x512xf32>
    %cst_13 = arith.constant 0.000000e+00 : f32
    %31 = vector.broadcast %cst_13 : f32 to vector<64x512xf32>
    %32 = arith.maximumf %30, %31 : vector<64x512xf32>
    %33 = arith.truncf %32 : vector<64x512xf32> to vector<64x512xbf16>
    %c0_14 = arith.constant 0 : index
    %c0_15 = arith.constant 0 : index
    %34 = vector.load %arg5[%c0_14, %c0_15] : memref<512x384xbf16, #tpu.memory_space<vmem>>, vector<512x384xbf16>
    %cst_16 = arith.constant dense<0.000000e+00> : vector<64x384xf32>
    %35 = tpu.matmul %33, %34, %cst_16 {dimension_numbers = #tpu.dot_dimension_numbers<[1], [0], [0], [1], [0, 0, 1, 1], [], []>} : vector<64x512xbf16>, vector<512x384xbf16>, vector<64x384xf32> -> vector<64x384xf32>
    %c0_17 = arith.constant 0 : index
    %c0_18 = arith.constant 0 : index
    %36 = vector.load %arg6[%c0_17, %c0_18] : memref<1x384xf32, #tpu.memory_space<vmem>>, vector<1x384xf32>
    %37 = vector.broadcast %36 : vector<1x384xf32> to vector<64x384xf32>
    %38 = arith.addf %35, %37 : vector<64x384xf32>
    %cst_19 = arith.constant 0.000000e+00 : f32
    %39 = vector.broadcast %cst_19 : f32 to vector<64x384xf32>
    %40 = arith.maximumf %38, %39 : vector<64x384xf32>
    %c0_20 = arith.constant 0 : index
    %c0_21 = arith.constant 0 : index
    %41 = vector.load %arg7[%c0_20, %c0_21] : memref<384x128xf32, #tpu.memory_space<vmem>>, vector<384x128xf32>
    %cst_22 = arith.constant dense<0.000000e+00> : vector<64x128xf32>
    %42 = tpu.matmul %40, %41, %cst_22 {dimension_numbers = #tpu.dot_dimension_numbers<[1], [0], [0], [1], [0, 0, 1, 1], [], []>} : vector<64x384xf32>, vector<384x128xf32>, vector<64x128xf32> -> vector<64x128xf32>
    %c0_23 = arith.constant 0 : index
    %c0_24 = arith.constant 0 : index
    %43 = vector.load %arg8[%c0_23, %c0_24] : memref<1x128xf32, #tpu.memory_space<vmem>>, vector<1x128xf32>
    %44 = vector.broadcast %43 : vector<1x128xf32> to vector<64x128xf32>
    %45 = arith.addf %42, %44 : vector<64x128xf32>
    %46 = math.tanh %45 : vector<64x128xf32>
    %c0_25 = arith.constant 0 : index
    %c0_26 = arith.constant 0 : index
    %47 = vector.load %arg9[%c0_25, %c0_26] : memref<64x128xf32, #tpu.memory_space<vmem>>, vector<64x128xf32>
    tpu.vector_store %arg9[%c0_25, %c0_26], %46 {strides = array<i32>} : memref<64x128xf32, #tpu.memory_space<vmem>>, vector<64x128xf32>,
    return
  }
  func.func @transform_0(%arg0: i32) -> (i32, i32) {
    %c0_i32 = arith.constant 0 : i32
    %c0_i32_0 = arith.constant 0 : i32
    %c0_i32_1 = arith.constant 0 : i32
    return %c0_i32, %c0_i32_0 : i32, i32
  }
  func.func @transform_1(%arg0: i32) -> (i32, i32) {
    %c0_i32 = arith.constant 0 : i32
    %c0_i32_0 = arith.constant 0 : i32
    %c0_i32_1 = arith.constant 0 : i32
    return %c0_i32, %c0_i32_0 : i32, i32
  }
  func.func @transform_2(%arg0: i32) -> (i32, i32) {
    %c0_i32 = arith.constant 0 : i32
    %c0_i32_0 = arith.constant 0 : i32
    %c0_i32_1 = arith.constant 0 : i32
    return %c0_i32, %c0_i32_0 : i32, i32
  }
  func.func @transform_3(%arg0: i32) -> (i32, i32) {
    %c0_i32 = arith.constant 0 : i32
    %c0_i32_0 = arith.constant 0 : i32
    %c0_i32_1 = arith.constant 0 : i32
    return %c0_i32, %c0_i32_0 : i32, i32
  }
  func.func @transform_4(%arg0: i32) -> (i32, i32) {
    %c0_i32 = arith.constant 0 : i32
    %c0_i32_0 = arith.constant 0 : i32
    %c0_i32_1 = arith.constant 0 : i32
    return %c0_i32, %c0_i32_0 : i32, i32
  }
  func.func @transform_5(%arg0: i32) -> (i32, i32) {
    %c0_i32 = arith.constant 0 : i32
    %c0_i32_0 = arith.constant 0 : i32
    %c0_i32_1 = arith.constant 0 : i32
    return %c0_i32, %c0_i32_0 : i32, i32
  }
  func.func @transform_6(%arg0: i32) -> (i32, i32) {
    %c0_i32 = arith.constant 0 : i32
    %c0_i32_0 = arith.constant 0 : i32
    %c0_i32_1 = arith.constant 0 : i32
    return %c0_i32, %c0_i32_0 : i32, i32
  }
  func.func @transform_7(%arg0: i32) -> (i32, i32) {
    %c0_i32 = arith.constant 0 : i32
    %c0_i32_0 = arith.constant 0 : i32
    %c0_i32_1 = arith.constant 0 : i32
    return %c0_i32, %c0_i32_0 : i32, i32
  }
  func.func @transform_8(%arg0: i32) -> (i32, i32) {
    %c0_i32 = arith.constant 0 : i32
    %c0_i32_0 = arith.constant 0 : i32
    %c0_i32_1 = arith.constant 0 : i32
    return %c0_i32, %c0_i32_0 : i32, i32
  }
}

</mosaic_0001>

<llo_original>
// kernel: tpu_custom_call.1
$region0: #{tpu_custom_call.1}
  #allocation0 [shape = 'u32[]', space=smem, size = 0x4, offset = 0x4, fixed_abs, tag = 'smem constant byte address 0x4 - core index']
  #allocation1 [shape = 'u32[144,128]{1,0:T(1,128)}', space=vmem, size = 0x12000, scoped, tag = 'internal scratch']
  %s0 = inlined_call_operand.vmem [shape: f32[64,32], index: 0, kind: input, shape index: {}]
  %s1 = inlined_call_operand.hbm [shape: f32[32,512], index: 1, kind: input, shape index: {}]
  %s2 = inlined_call_operand.vmem [shape: f32[1,512], index: 2, kind: input, shape index: {}]
  %s3 = inlined_call_operand.vmem [shape: f32[1,512], index: 3, kind: input, shape index: {}]
  %s4 = inlined_call_operand.hbm [shape: bf16[512,384], index: 4, kind: input, shape index: {}]
  %s5 = inlined_call_operand.vmem [shape: f32[1,384], index: 5, kind: input, shape index: {}]
  %s6 = inlined_call_operand.hbm [shape: f32[384,128], index: 6, kind: input, shape index: {}]
  %s7 = inlined_call_operand.vmem [shape: f32[1,128], index: 7, kind: input, shape index: {}]
  %s8 = inlined_call_operand.hbm [shape: f32[64,128], index: 8, kind: output, shape index: {}]
  %s9 = sld [smem:[#allocation0]]
  $region54: #{tpu_custom_call.1} parent=0
    _
  %s11 = ssub.s32 1, %s9
  %s12 = scalar_select 0, %s11, %s9
  $region1: #{tpu_custom_call.1} parent=0
    #allocation2 [shape = 'u8[65536]{0}', space=vmem, size = 0x10000, scoped, tag = 'input window, operand 1, single buffered']
    #allocation3 [shape = 's32[1]{0}', space=sflag, size = 0x4, scoped, tag = 'scoped memory for tpu_custom_call.1']
    #allocation4 [shape = 's32[1]{0}', space=sflag, size = 0x4, scoped, tag = 'scoped memory for tpu_custom_call.1']
    #allocation5 [shape = 'u8[393216]{0}', space=vmem, size = 0x60000, scoped, tag = 'input window, operand 4, single buffered']
    #allocation6 [shape = 's32[1]{0}', space=sflag, size = 0x4, scoped, tag = 'scoped memory for tpu_custom_call.1']
    #allocation7 [shape = 'u8[196608]{0}', space=vmem, size = 0x30000, scoped, tag = 'input window, operand 6, single buffered']
    #allocation8 [shape = 'u8[32768]{0}', space=vmem, size = 0x8000, scoped, tag = 'output window, operand 0, single buffered']
    %13 = vsyncpa [#allocation3], 0
    %14 = vsyncpa [#allocation6], 0
    %15 = vsyncpa [#allocation4], 0
    // Predicated region
    $region2: #{tpu_custom_call.1} parent=1 // pred_check
      _
    $region3: #{tpu_custom_call.1} parent=1 // pred_check_branch
      %17 = sbr.rel (0) target = $region5
    $region4: #{tpu_custom_call.1} parent=1 // pred_region
      _
    $region5: #{tpu_custom_call.1} parent=1 // pred_fallthru
      _
    // Predicated region
    $region6: #{tpu_custom_call.1} parent=1 // pred_check
      _
    $region7: #{tpu_custom_call.1} parent=1 // pred_check_branch
      %19 = sbr.rel (0) target = $region9
    $region8: #{tpu_custom_call.1} parent=1 // pred_region
      %s21 = ssub.s32 2048, 2048
      %22 = vsyncadd [#allocation3], %s21
      %s23 = sshll.u32 [#allocation2], 4
      %s24 = int_to_ptr.vmem [resolvable:$true] %s23
      %29 = dma.hbm_to_vmem [thread:$0]  %s1, 2048, %s24, [#allocation3], 512, 512, 32
    $region9: #{tpu_custom_call.1} parent=1 // pred_fallthru
      _
    // Predicated region
    $region10: #{tpu_custom_call.1} parent=1 // pred_check
      _
    $region11: #{tpu_custom_call.1} parent=1 // pred_check_branch
      %31 = sbr.rel (0) target = $region13
    $region12: #{tpu_custom_call.1} parent=1 // pred_region
      _
    $region13: #{tpu_custom_call.1} parent=1 // pred_fallthru
      _
    // Predicated region
    $region14: #{tpu_custom_call.1} parent=1 // pred_check
      _
    $region15: #{tpu_custom_call.1} parent=1 // pred_check_branch
      %33 = sbr.rel (0) target = $region17
    $region16: #{tpu_custom_call.1} parent=1 // pred_region
      _
    $region17: #{tpu_custom_call.1} parent=1 // pred_fallthru
      _
    // Predicated region
    $region18: #{tpu_custom_call.1} parent=1 // pred_check
      _
    $region19: #{tpu_custom_call.1} parent=1 // pred_check_branch
      %35 = sbr.rel (0) target = $region21
    $region20: #{tpu_custom_call.1} parent=1 // pred_region
      %s37 = ssub.s32 12288, 12288
      %38 = vsyncadd [#allocation6], %s37
      %s39 = sshll.u32 [#allocation5], 4
      %s40 = int_to_ptr.vmem [resolvable:$true] %s39
      %45 = dma.hbm_to_vmem [thread:$0]  %s4, 12288, %s40, [#allocation6], 192, 192, 12
    $region21: #{tpu_custom_call.1} parent=1 // pred_fallthru
      _
    // Predicated region
    $region22: #{tpu_custom_call.1} parent=1 // pred_check
      _
    $region23: #{tpu_custom_call.1} parent=1 // pred_check_branch
      %47 = sbr.rel (0) target = $region25
    $region24: #{tpu_custom_call.1} parent=1 // pred_region
      _
    $region25: #{tpu_custom_call.1} parent=1 // pred_fallthru
      _
    // Predicated region
    $region26: #{tpu_custom_call.1} parent=1 // pred_check
      _
    $region27: #{tpu_custom_call.1} parent=1 // pred_check_branch
      %49 = sbr.rel (0) target = $region29
    $region28: #{tpu_custom_call.1} parent=1 // pred_region
      %s51 = ssub.s32 6144, 6144
      %52 = vsyncadd [#allocation6], %s51
      %s53 = sshll.u32 [#allocation7], 4
      %s54 = int_to_ptr.vmem [resolvable:$true] %s53
      %59 = dma.hbm_to_vmem [thread:$0]  %s6, 6144, %s54, [#allocation6], 128, 128, 8
    $region29: #{tpu_custom_call.1} parent=1 // pred_fallthru
      _
    // Predicated region
    $region30: #{tpu_custom_call.1} parent=1 // pred_check
      _
    $region31: #{tpu_custom_call.1} parent=1 // pred_check_branch
      %61 = sbr.rel (0) target = $region33
    $region32: #{tpu_custom_call.1} parent=1 // pred_region
      _
    $region33: #{tpu_custom_call.1} parent=1 // pred_fallthru
      _
    // Predicated region
    $region34: #{tpu_custom_call.1} parent=1 // pred_check
      _
    $region35: #{tpu_custom_call.1} parent=1 // pred_check_branch
      %63 = sbr.rel (0) target = $region37
    $region36: #{tpu_custom_call.1} parent=1 // pred_region
      %64 = dma.done [#allocation3], 2048
    $region37: #{tpu_custom_call.1} parent=1 // pred_fallthru
      _
    // Predicated region
    $region38: #{tpu_custom_call.1} parent=1 // pred_check
      _
    $region39: #{tpu_custom_call.1} parent=1 // pred_check_branch
      %66 = sbr.rel (0) target = $region41
    $region40: #{tpu_custom_call.1} parent=1 // pred_region
      %67 = dma.done [#allocation6], 12288
    $region41: #{tpu_custom_call.1} parent=1 // pred_fallthru
      _
    // Predicated region
    $region42: #{tpu_custom_call.1} parent=1 // pred_check
      _
    $region43: #{tpu_custom_call.1} parent=1 // pred_check_branch
      %69 = sbr.rel (0) target = $region45
    $region44: #{tpu_custom_call.1} parent=1 // pred_region
      %70 = dma.done [#allocation6], 6144
    $region45: #{tpu_custom_call.1} parent=1 // pred_fallthru
      _
    %v72 = vld [vmem:[%s0] sm:$0xff]
    %v73 = vld [vmem:[%s0 + $0x8] sm:$0xff]
    %v74 = vld [vmem:[%s0 + $0x10] sm:$0xff]
    %v75 = vld [vmem:[%s0 + $0x18] sm:$0xff]
    %v76 = vld [vmem:[%s0 + $0x20] sm:$0xff]
    %v77 = vld [vmem:[%s0 + $0x28] sm:$0xff]
    %v78 = vld [vmem:[%s0 + $0x30] sm:$0xff]
    %v79 = vld [vmem:[%s0 + $0x38] sm:$0xff]
    %v80 = vld [vmem:[#allocation2] sm:$0xff]
    %v81 = vld [vmem:[#allocation2 + $0x8] sm:$0xff]
    %v82 = vld [vmem:[#allocation2 + $0x10] sm:$0xff]
    %v83 = vld [vmem:[#allocation2 + $0x18] sm:$0xff]
    %v84 = vld [vmem:[#allocation2 + $0x20] sm:$0xff]
    %v85 = vld [vmem:[#allocation2 + $0x28] sm:$0xff]
    %v86 = vld [vmem:[#allocation2 + $0x30] sm:$0xff]
    %v87 = vld [vmem:[#allocation2 + $0x38] sm:$0xff]
    %v88 = vld [vmem:[#allocation2 + $0x40] sm:$0xff]
    %v89 = vld [vmem:[#allocation2 + $0x48] sm:$0xff]
    %v90 = vld [vmem:[#allocation2 + $0x50] sm:$0xff]
    %v91 = vld [vmem:[#allocation2 + $0x58] sm:$0xff]
    %v92 = vld [vmem:[#allocation2 + $0x60] sm:$0xff]
    %v93 = vld [vmem:[#allocation2 + $0x68] sm:$0xff]
    %v94 = vld [vmem:[#allocation2 + $0x70] sm:$0xff]
    %v95 = vld [vmem:[#allocation2 + $0x78] sm:$0xff]
    %vm96 = vcmask 261120
    %v98 = vsel %vm96, %v72, 0
    %v101 = vsel %vm96, %v73, 0
    %v104 = vsel %vm96, %v74, 0
    %v107 = vsel %vm96, %v75, 0
    %v110 = vsel %vm96, %v76, 0
    %v113 = vsel %vm96, %v77, 0
    %v116 = vsel %vm96, %v78, 0
    %v119 = vsel %vm96, %v79, 0
    %121 = vmatprep.subr.mxu0 0.0
    %122 = vmatpush1.msra.mxu0 0.0
    %123 = vmatprep.subr.mxu0 0.0
    %124 = vmatpush1.msra.mxu0 0.0
    %125 = vmatprep.subr.mxu0 0.0
    %126 = vmatpush1.msra.mxu0 0.0
    %127 = vmatprep.subr.mxu0 0.0
    %128 = vmatpush1.msra.mxu0 0.0
    %129 = vmatprep.subr.mxu0 0.0
    %130 = vmatpush1.msra.mxu0 0.0
    %131 = vmatprep.subr.mxu0 0.0
    %132 = vmatpush1.msra.mxu0 0.0
    %133 = vmatprep.subr.mxu0 0.0
    %134 = vmatpush1.msra.mxu0 0.0
    %135 = vmatprep.subr.mxu0 0.0
    %136 = vmatpush1.msra.mxu0 0.0
    %137 = vmatprep.subr.mxu0 0.0
    %138 = vmatpush1.msra.mxu0 0.0
    %139 = vmatprep.subr.mxu0 0.0
    %140 = vmatpush1.msra.mxu0 0.0
    %141 = vmatprep.subr.mxu0 0.0
    %142 = vmatpush1.msra.mxu0 0.0
    %143 = vmatprep.subr.mxu0 0.0
    %144 = vmatpush1.msra.mxu0 0.0
    %145 = vmatprep.subr.mxu0 %v93
    %146 = vmatpush1.msra.mxu0 %v92
    %147 = vmatprep.subr.mxu0 %v89
    %148 = vmatpush1.msra.mxu0 %v88
    %149 = vmatprep.subr.mxu0 %v85
    %150 = vmatpush1.msra.mxu0 %v84
    %151 = vmatprep.subr.mxu0 %v81
    %152 = vmatpush1.msra.mxu0 %v80
    %153 = vmatprep.subr.mxu0 0.0
    %154 = vmatpush2.msra.mxu0 0.0
    %155 = vmatprep.subr.mxu0 0.0
    %156 = vmatpush2.msra.mxu0 0.0
    %157 = vmatprep.subr.mxu0 0.0
    %158 = vmatpush2.msra.mxu0 0.0
    %159 = vmatprep.subr.mxu0 0.0
    %160 = vmatpush2.msra.mxu0 0.0
    %161 = vmatprep.subr.mxu0 0.0
    %162 = vmatpush2.msra.mxu0 0.0
    %163 = vmatprep.subr.mxu0 0.0
    %164 = vmatpush2.msra.mxu0 0.0
    %165 = vmatprep.subr.mxu0 0.0
    %166 = vmatpush2.msra.mxu0 0.0
    %167 = vmatprep.subr.mxu0 0.0
    %168 = vmatpush2.msra.mxu0 0.0
    %169 = vmatprep.subr.mxu0 0.0
    %170 = vmatpush2.msra.mxu0 0.0
    %171 = vmatprep.subr.mxu0 0.0
    %172 = vmatpush2.msra.mxu0 0.0
    %173 = vmatprep.subr.mxu0 0.0
    %174 = vmatpush2.msra.mxu0 0.0
    %175 = vmatprep.subr.mxu0 0.0
    %176 = vmatpush2.msra.mxu0 0.0
    %177 = vmatprep.subr.mxu0 0.0
    %178 = vmatpush2.msra.mxu0 0.0
    %179 = vmatprep.subr.mxu0 0.0
    %180 = vmatpush2.msra.mxu0 0.0
    %181 = vmatprep.subr.mxu0 0.0
    %182 = vmatpush2.msra.mxu0 0.0
    %183 = vmatprep.subr.mxu0 0.0
    %184 = vmatpush2.msra.mxu0 0.0
    %185 = vmatprep.mubr.f32.mxu0 0.0
    %186 = vmatmul.mubr.f32.gmra.mxu0 %v98
    %v187 = vpop.f32.mrf.mxu0
    %v188 = vadd.f32 0.0, %v187
    %v189 = vpop.f32.mrf.mxu0
    %v190 = vadd.f32 0.0, %v189
    %191 = vmatprep.mubr.f32.mxu0 0.0
    %192 = vmatmul.mubr.f32.gmra.mxu0 %v101
    %v193 = vpop.f32.mrf.mxu0
    %v194 = vadd.f32 0.0, %v193
    %v195 = vpop.f32.mrf.mxu0
    %v196 = vadd.f32 0.0, %v195
    %197 = vmatprep.mubr.f32.mxu0 0.0
    %198 = vmatmul.mubr.f32.gmra.mxu0 %v104
    %v199 = vpop.f32.mrf.mxu0
    %v200 = vadd.f32 0.0, %v199
    %v201 = vpop.f32.mrf.mxu0
    %v202 = vadd.f32 0.0, %v201
    %203 = vmatprep.mubr.f32.mxu0 0.0
    %204 = vmatmul.mubr.f32.gmra.mxu0 %v107
    %v205 = vpop.f32.mrf.mxu0
    %v206 = vadd.f32 0.0, %v205
    %v207 = vpop.f32.mrf.mxu0
    %v208 = vadd.f32 0.0, %v207
    %209 = vmatprep.mubr.f32.mxu0 0.0
    %210 = vmatmul.mubr.f32.gmra.mxu0 %v110
    %v211 = vpop.f32.mrf.mxu0
    %v212 = vadd.f32 0.0, %v211
    %v213 = vpop.f32.mrf.mxu0
    %v214 = vadd.f32 0.0, %v213
    %215 = vmatprep.mubr.f32.mxu0 0.0
    %216 = vmatmul.mubr.f32.gmra.mxu0 %v113
    %v217 = vpop.f32.mrf.mxu0
    %v218 = vadd.f32 0.0, %v217
    %v219 = vpop.f32.mrf.mxu0
    %v220 = vadd.f32 0.0, %v219
    %221 = vmatprep.mubr.f32.mxu0 0.0
    %222 = vmatmul.mubr.f32.gmra.mxu0 %v116
    %v223 = vpop.f32.mrf.mxu0
    %v224 = vadd.f32 0.0, %v223
    %v225 = vpop.f32.mrf.mxu0
    %v226 = vadd.f32 0.0, %v225
    %227 = vmatprep.mubr.f32.mxu0 0.0
    %228 = vmatmul.mubr.f32.gmra.mxu0 %v119
    %v229 = vpop.f32.mrf.mxu0
    %v230 = vadd.f32 0.0, %v229
    %v231 = vpop.f32.mrf.mxu0
    %v232 = vadd.f32 0.0, %v231
    %233 = vdwg.mxu0
    %234 = vmatprep.subr.mxu0 0.0
    %235 = vmatpush1.msra.mxu0 0.0
    %236 = vmatprep.subr.mxu0 0.0
    %237 = vmatpush1.msra.mxu0 0.0
    %238 = vmatprep.subr.mxu0 0.0
    %239 = vmatpush1.msra.mxu0 0.0
    %240 = vmatprep.subr.mxu0 0.0
    %241 = vmatpush1.msra.mxu0 0.0
    %242 = vmatprep.subr.mxu0 0.0
    %243 = vmatpush1.msra.mxu0 0.0
    %244 = vmatprep.subr.mxu0 0.0
    %245 = vmatpush1.msra.mxu0 0.0
    %246 = vmatprep.subr.mxu0 0.0
    %247 = vmatpush1.msra.mxu0 0.0
    %248 = vmatprep.subr.mxu0 0.0
    %249 = vmatpush1.msra.mxu0 0.0
    %250 = vmatprep.subr.mxu0 0.0
    %251 = vmatpush1.msra.mxu0 0.0
    %252 = vmatprep.subr.mxu0 0.0
    %253 = vmatpush1.msra.mxu0 0.0
    %254 = vmatprep.subr.mxu0 0.0
    %255 = vmatpush1.msra.mxu0 0.0
    %256 = vmatprep.subr.mxu0 0.0
    %257 = vmatpush1.msra.mxu0 0.0
    %258 = vmatprep.subr.mxu0 %v95
    %259 = vmatpush1.msra.mxu0 %v94
    %260 = vmatprep.subr.mxu0 %v91
    %261 = vmatpush1.msra.mxu0 %v90
    %262 = vmatprep.subr.mxu0 %v87
    %263 = vmatpush1.msra.mxu0 %v86
    %264 = vmatprep.subr.mxu0 %v83
    %265 = vmatpush1.msra.mxu0 %v82
    %266 = vmatprep.subr.mxu0 0.0
    %267 = vmatpush2.msra.mxu0 0.0
    %268 = vmatprep.subr.mxu0 0.0
    %269 = vmatpush2.msra.mxu0 0.0
    %270 = vmatprep.subr.mxu0 0.0
    %271 = vmatpush2.msra.mxu0 0.0
    %272 = vmatprep.subr.mxu0 0.0
    %273 = vmatpush2.msra.mxu0 0.0
    %274 = vmatprep.subr.mxu0 0.0
    %275 = vmatpush2.msra.mxu0 0.0
    %276 = vmatprep.subr.mxu0 0.0
    %277 = vmatpush2.msra.mxu0 0.0
    %278 = vmatprep.subr.mxu0 0.0
    %279 = vmatpush2.msra.mxu0 0.0
    %280 = vmatprep.subr.mxu0 0.0
    %281 = vmatpush2.msra.mxu0 0.0
    %282 = vmatprep.subr.mxu0 0.0
    %283 = vmatpush2.msra.mxu0 0.0
    %284 = vmatprep.subr.mxu0 0.0
    %285 = vmatpush2.msra.mxu0 0.0
    %286 = vmatprep.subr.mxu0 0.0
    %287 = vmatpush2.msra.mxu0 0.0
    %288 = vmatprep.subr.mxu0 0.0
    %289 = vmatpush2.msra.mxu0 0.0
    %290 = vmatprep.subr.mxu0 0.0
    %291 = vmatpush2.msra.mxu0 0.0
    %292 = vmatprep.subr.mxu0 0.0
    %293 = vmatpush2.msra.mxu0 0.0
    %294 = vmatprep.subr.mxu0 0.0
    %295 = vmatpush2.msra.mxu0 0.0
    %296 = vmatprep.subr.mxu0 0.0
    %297 = vmatpush2.msra.mxu0 0.0
    %298 = vmatprep.mubr.f32.mxu0 0.0
    %299 = vmatmul.mubr.f32.gmra.mxu0 %v98
    %v300 = vpop.f32.mrf.mxu0
    %v301 = vadd.f32 0.0, %v300
    %v302 = vpop.f32.mrf.mxu0
    %v303 = vadd.f32 0.0, %v302
    %304 = vmatprep.mubr.f32.mxu0 0.0
    %305 = vmatmul.mubr.f32.gmra.mxu0 %v101
    %v306 = vpop.f32.mrf.mxu0
    %v307 = vadd.f32 0.0, %v306
    %v308 = vpop.f32.mrf.mxu0
    %v309 = vadd.f32 0.0, %v308
    %310 = vmatprep.mubr.f32.mxu0 0.0
    %311 = vmatmul.mubr.f32.gmra.mxu0 %v104
    %v312 = vpop.f32.mrf.mxu0
    %v313 = vadd.f32 0.0, %v312
    %v314 = vpop.f32.mrf.mxu0
    %v315 = vadd.f32 0.0, %v314
    %316 = vmatprep.mubr.f32.mxu0 0.0
    %317 = vmatmul.mubr.f32.gmra.mxu0 %v107
    %v318 = vpop.f32.mrf.mxu0
    %v319 = vadd.f32 0.0, %v318
    %v320 = vpop.f32.mrf.mxu0
    %v321 = vadd.f32 0.0, %v320
    %322 = vmatprep.mubr.f32.mxu0 0.0
    %323 = vmatmul.mubr.f32.gmra.mxu0 %v110
    %v324 = vpop.f32.mrf.mxu0
    %v325 = vadd.f32 0.0, %v324
    %v326 = vpop.f32.mrf.mxu0
    %v327 = vadd.f32 0.0, %v326
    %328 = vmatprep.mubr.f32.mxu0 0.0
    %329 = vmatmul.mubr.f32.gmra.mxu0 %v113
    %v330 = vpop.f32.mrf.mxu0
    %v331 = vadd.f32 0.0, %v330
    %v332 = vpop.f32.mrf.mxu0
    %v333 = vadd.f32 0.0, %v332
    %334 = vmatprep.mubr.f32.mxu0 0.0
    %335 = vmatmul.mubr.f32.gmra.mxu0 %v116
    %v336 = vpop.f32.mrf.mxu0
    %v337 = vadd.f32 0.0, %v336
    %v338 = vpop.f32.mrf.mxu0
    %v339 = vadd.f32 0.0, %v338
    %340 = vmatprep.mubr.f32.mxu0 0.0
    %341 = vmatmul.mubr.f32.gmra.mxu0 %v119
    %v342 = vpop.f32.mrf.mxu0
    %v343 = vadd.f32 0.0, %v342
    %v344 = vpop.f32.mrf.mxu0
    %v345 = vadd.f32 0.0, %v344
    %346 = vdwg.mxu0
    %v347 = vadd.f32 %v188, %v194
    %v348 = vrot.slane %v347, 4
    %v349 = vadd.f32 %v347, %v348
    %v350 = vrot.slane %v349, 2
    %v351 = vadd.f32 %v349, %v350
    %v352 = vrot.slane %v351, 1
    %v353 = vadd.f32 %v351, %v352
    %v354 = vadd.f32 %v190, %v196
    %v355 = vrot.slane %v354, 4
    %v356 = vadd.f32 %v354, %v355
    %v357 = vrot.slane %v356, 2
    %v358 = vadd.f32 %v356, %v357
    %v359 = vrot.slane %v358, 1
    %v360 = vadd.f32 %v358, %v359
    %v361 = vadd.f32 %v301, %v307
    %v362 = vrot.slane %v361, 4
    %v363 = vadd.f32 %v361, %v362
    %v364 = vrot.slane %v363, 2
    %v365 = vadd.f32 %v363, %v364
    %v366 = vrot.slane %v365, 1
    %v367 = vadd.f32 %v365, %v366
    %v368 = vadd.f32 %v303, %v309
    %v369 = vrot.slane %v368, 4
    %v370 = vadd.f32 %v368, %v369
    %v371 = vrot.slane %v370, 2
    %v372 = vadd.f32 %v370, %v371
    %v373 = vrot.slane %v372, 1
    %v374 = vadd.f32 %v372, %v373
    %v375 = vadd.f32 %v200, %v206
    %v376 = vrot.slane %v375, 4
    %v377 = vadd.f32 %v375, %v376
    %v378 = vrot.slane %v377, 2
    %v379 = vadd.f32 %v377, %v378
    %v380 = vrot.slane %v379, 1
    %v381 = vadd.f32 %v379, %v380
    %v382 = vadd.f32 %v202, %v208
    %v383 = vrot.slane %v382, 4
    %v384 = vadd.f32 %v382, %v383
    %v385 = vrot.slane %v384, 2
    %v386 = vadd.f32 %v384, %v385
    %v387 = vrot.slane %v386, 1
    %v388 = vadd.f32 %v386, %v387
    %v389 = vadd.f32 %v313, %v319
    %v390 = vrot.slane %v389, 4
    %v391 = vadd.f32 %v389, %v390
    %v392 = vrot.slane %v391, 2
    %v393 = vadd.f32 %v391, %v392
    %v394 = vrot.slane %v393, 1
    %v395 = vadd.f32 %v393, %v394
    %v396 = vadd.f32 %v315, %v321
    %v397 = vrot.slane %v396, 4
    %v398 = vadd.f32 %v396, %v397
    %v399 = vrot.slane %v398, 2
    %v400 = vadd.f32 %v398, %v399
    %v401 = vrot.slane %v400, 1
    %v402 = vadd.f32 %v400, %v401
    %v403 = vadd.f32 %v212, %v218
    %v404 = vrot.slane %v403, 4
    %v405 = vadd.f32 %v403, %v404
    %v406 = vrot.slane %v405, 2
    %v407 = vadd.f32 %v405, %v406
    %v408 = vrot.slane %v407, 1
    %v409 = vadd.f32 %v407, %v408
    %v410 = vadd.f32 %v214, %v220
    %v411 = vrot.slane %v410, 4
    %v412 = vadd.f32 %v410, %v411
    %v413 = vrot.slane %v412, 2
    %v414 = vadd.f32 %v412, %v413
    %v415 = vrot.slane %v414, 1
    %v416 = vadd.f32 %v414, %v415
    %v417 = vadd.f32 %v325, %v331
    %v418 = vrot.slane %v417, 4
    %v419 = vadd.f32 %v417, %v418
    %v420 = vrot.slane %v419, 2
    %v421 = vadd.f32 %v419, %v420
    %v422 = vrot.slane %v421, 1
    %v423 = vadd.f32 %v421, %v422
    %v424 = vadd.f32 %v327, %v333
    %v425 = vrot.slane %v424, 4
    %v426 = vadd.f32 %v424, %v425
    %v427 = vrot.slane %v426, 2
    %v428 = vadd.f32 %v426, %v427
    %v429 = vrot.slane %v428, 1
    %v430 = vadd.f32 %v428, %v429
    %v431 = vadd.f32 %v224, %v230
    %v432 = vrot.slane %v431, 4
    %v433 = vadd.f32 %v431, %v432
    %v434 = vrot.slane %v433, 2
    %v435 = vadd.f32 %v433, %v434
    %v436 = vrot.slane %v435, 1
    %v437 = vadd.f32 %v435, %v436
    %v438 = vadd.f32 %v226, %v232
    %v439 = vrot.slane %v438, 4
    %v440 = vadd.f32 %v438, %v439
    %v441 = vrot.slane %v440, 2
    %v442 = vadd.f32 %v440, %v441
    %v443 = vrot.slane %v442, 1
    %v444 = vadd.f32 %v442, %v443
    %v445 = vadd.f32 %v337, %v343
    %v446 = vrot.slane %v445, 4
    %v447 = vadd.f32 %v445, %v446
    %v448 = vrot.slane %v447, 2
    %v449 = vadd.f32 %v447, %v448
    %v450 = vrot.slane %v449, 1
    %v451 = vadd.f32 %v449, %v450
    %v452 = vadd.f32 %v339, %v345
    %v453 = vrot.slane %v452, 4
    %v454 = vadd.f32 %v452, %v453
    %v455 = vrot.slane %v454, 2
    %v456 = vadd.f32 %v454, %v455
    %v457 = vrot.slane %v456, 1
    %v458 = vadd.f32 %v456, %v457
    %v459 = vmul.f32 %v188, %v188
    %v460 = vmul.f32 %v190, %v190
    %v461 = vmul.f32 %v301, %v301
    %v462 = vmul.f32 %v303, %v303
    %v463 = vmul.f32 %v194, %v194
    %v464 = vmul.f32 %v196, %v196
    %v465 = vmul.f32 %v307, %v307
    %v466 = vmul.f32 %v309, %v309
    %v467 = vmul.f32 %v200, %v200
    %v468 = vmul.f32 %v202, %v202
    %v469 = vmul.f32 %v313, %v313
    %v470 = vmul.f32 %v315, %v315
    %v471 = vmul.f32 %v206, %v206
    %v472 = vmul.f32 %v208, %v208
    %v473 = vmul.f32 %v319, %v319
    %v474 = vmul.f32 %v321, %v321
    %v475 = vmul.f32 %v212, %v212
    %v476 = vmul.f32 %v214, %v214
    %v477 = vmul.f32 %v325, %v325
    %v478 = vmul.f32 %v327, %v327
    %v479 = vmul.f32 %v218, %v218
    %v480 = vmul.f32 %v220, %v220
    %v481 = vmul.f32 %v331, %v331
    %v482 = vmul.f32 %v333, %v333
    %v483 = vmul.f32 %v224, %v224
    %v484 = vmul.f32 %v226, %v226
    %v485 = vmul.f32 %v337, %v337
    %v486 = vmul.f32 %v339, %v339
    %v487 = vmul.f32 %v230, %v230
    %v488 = vmul.f32 %v232, %v232
    %v489 = vmul.f32 %v343, %v343
    %v490 = vmul.f32 %v345, %v345
    %v491 = vadd.f32 %v459, %v463
    %v492 = vrot.slane %v491, 4
    %v493 = vadd.f32 %v491, %v492
    %v494 = vrot.slane %v493, 2
    %v495 = vadd.f32 %v493, %v494
    %v496 = vrot.slane %v495, 1
    %v497 = vadd.f32 %v495, %v496
    %v498 = vadd.f32 %v460, %v464
    %v499 = vrot.slane %v498, 4
    %v500 = vadd.f32 %v498, %v499
    %v501 = vrot.slane %v500, 2
    %v502 = vadd.f32 %v500, %v501
    %v503 = vrot.slane %v502, 1
    %v504 = vadd.f32 %v502, %v503
    %v505 = vadd.f32 %v461, %v465
    %v506 = vrot.slane %v505, 4
    %v507 = vadd.f32 %v505, %v506
    %v508 = vrot.slane %v507, 2
    %v509 = vadd.f32 %v507, %v508
    %v510 = vrot.slane %v509, 1
    %v511 = vadd.f32 %v509, %v510
    %v512 = vadd.f32 %v462, %v466
    %v513 = vrot.slane %v512, 4
    %v514 = vadd.f32 %v512, %v513
    %v515 = vrot.slane %v514, 2
    %v516 = vadd.f32 %v514, %v515
    %v517 = vrot.slane %v516, 1
    %v518 = vadd.f32 %v516, %v517
    %v519 = vadd.f32 %v467, %v471
    %v520 = vrot.slane %v519, 4
    %v521 = vadd.f32 %v519, %v520
    %v522 = vrot.slane %v521, 2
    %v523 = vadd.f32 %v521, %v522
    %v524 = vrot.slane %v523, 1
    %v525 = vadd.f32 %v523, %v524
    %v526 = vadd.f32 %v468, %v472
    %v527 = vrot.slane %v526, 4
    %v528 = vadd.f32 %v526, %v527
    %v529 = vrot.slane %v528, 2
    %v530 = vadd.f32 %v528, %v529
    %v531 = vrot.slane %v530, 1
    %v532 = vadd.f32 %v530, %v531
    %v533 = vadd.f32 %v469, %v473
    %v534 = vrot.slane %v533, 4
    %v535 = vadd.f32 %v533, %v534
    %v536 = vrot.slane %v535, 2
    %v537 = vadd.f32 %v535, %v536
    %v538 = vrot.slane %v537, 1
    %v539 = vadd.f32 %v537, %v538
    %v540 = vadd.f32 %v470, %v474
    %v541 = vrot.slane %v540, 4
    %v542 = vadd.f32 %v540, %v541
    %v543 = vrot.slane %v542, 2
    %v544 = vadd.f32 %v542, %v543
    %v545 = vrot.slane %v544, 1
    %v546 = vadd.f32 %v544, %v545
    %v547 = vadd.f32 %v475, %v479
    %v548 = vrot.slane %v547, 4
    %v549 = vadd.f32 %v547, %v548
    %v550 = vrot.slane %v549, 2
    %v551 = vadd.f32 %v549, %v550
    %v552 = vrot.slane %v551, 1
    %v553 = vadd.f32 %v551, %v552
    %v554 = vadd.f32 %v476, %v480
    %v555 = vrot.slane %v554, 4
    %v556 = vadd.f32 %v554, %v555
    %v557 = vrot.slane %v556, 2
    %v558 = vadd.f32 %v556, %v557
    %v559 = vrot.slane %v558, 1
    %v560 = vadd.f32 %v558, %v559
    %v561 = vadd.f32 %v477, %v481
    %v562 = vrot.slane %v561, 4
    %v563 = vadd.f32 %v561, %v562
    %v564 = vrot.slane %v563, 2
    %v565 = vadd.f32 %v563, %v564
    %v566 = vrot.slane %v565, 1
    %v567 = vadd.f32 %v565, %v566
    %v568 = vadd.f32 %v478, %v482
    %v569 = vrot.slane %v568, 4
    %v570 = vadd.f32 %v568, %v569
    %v571 = vrot.slane %v570, 2
    %v572 = vadd.f32 %v570, %v571
    %v573 = vrot.slane %v572, 1
    %v574 = vadd.f32 %v572, %v573
    %v575 = vadd.f32 %v483, %v487
    %v576 = vrot.slane %v575, 4
    %v577 = vadd.f32 %v575, %v576
    %v578 = vrot.slane %v577, 2
    %v579 = vadd.f32 %v577, %v578
    %v580 = vrot.slane %v579, 1
    %v581 = vadd.f32 %v579, %v580
    %v582 = vadd.f32 %v484, %v488
    %v583 = vrot.slane %v582, 4
    %v584 = vadd.f32 %v582, %v583
    %v585 = vrot.slane %v584, 2
    %v586 = vadd.f32 %v584, %v585
    %v587 = vrot.slane %v586, 1
    %v588 = vadd.f32 %v586, %v587
    %v589 = vadd.f32 %v485, %v489
    %v590 = vrot.slane %v589, 4
    %v591 = vadd.f32 %v589, %v590
    %v592 = vrot.slane %v591, 2
    %v593 = vadd.f32 %v591, %v592
    %v594 = vrot.slane %v593, 1
    %v595 = vadd.f32 %v593, %v594
    %v596 = vadd.f32 %v486, %v490
    %v597 = vrot.slane %v596, 4
    %v598 = vadd.f32 %v596, %v597
    %v599 = vrot.slane %v598, 2
    %v600 = vadd.f32 %v598, %v599
    %v601 = vrot.slane %v600, 1
    %v602 = vadd.f32 %v600, %v601
    %v603 = vmul.f32 %v353, 0.0625
    %v604 = vmul.f32 %v360, 0.0625
    %v605 = vmul.f32 %v367, 0.0625
    %v606 = vmul.f32 %v374, 0.0625
    %v607 = vmul.f32 %v381, 0.0625
    %v608 = vmul.f32 %v388, 0.0625
    %v609 = vmul.f32 %v395, 0.0625
    %v610 = vmul.f32 %v402, 0.0625
    %v611 = vmul.f32 %v409, 0.0625
    %v612 = vmul.f32 %v416, 0.0625
    %v613 = vmul.f32 %v423, 0.0625
    %v614 = vmul.f32 %v430, 0.0625
    %v615 = vmul.f32 %v437, 0.0625
    %v616 = vmul.f32 %v444, 0.0625
    %v617 = vmul.f32 %v451, 0.0625
    %v618 = vmul.f32 %v458, 0.0625
    %v619 = vmul.f32 %v497, 0.0625
    %v620 = vmul.f32 %v504, 0.0625
    %v621 = vmul.f32 %v511, 0.0625
    %v622 = vmul.f32 %v518, 0.0625
    %v623 = vmul.f32 %v525, 0.0625
    %v624 = vmul.f32 %v532, 0.0625
    %v625 = vmul.f32 %v539, 0.0625
    %v626 = vmul.f32 %v546, 0.0625
    %v627 = vmul.f32 %v553, 0.0625
    %v628 = vmul.f32 %v560, 0.0625
    %v629 = vmul.f32 %v567, 0.0625
    %v630 = vmul.f32 %v574, 0.0625
    %v631 = vmul.f32 %v581, 0.0625
    %v632 = vmul.f32 %v588, 0.0625
    %v633 = vmul.f32 %v595, 0.0625
    %v634 = vmul.f32 %v602, 0.0625
    %v635 = vmul.f32 %v603, %v603
    %v636 = vmul.f32 %v604, %v604
    %v637 = vmul.f32 %v605, %v605
    %v638 = vmul.f32 %v606, %v606
    %v639 = vmul.f32 %v607, %v607
    %v640 = vmul.f32 %v608, %v608
    %v641 = vmul.f32 %v609, %v609
    %v642 = vmul.f32 %v610, %v610
    %v643 = vmul.f32 %v611, %v611
    %v644 = vmul.f32 %v612, %v612
    %v645 = vmul.f32 %v613, %v613
    %v646 = vmul.f32 %v614, %v614
    %v647 = vmul.f32 %v615, %v615
    %v648 = vmul.f32 %v616, %v616
    %v649 = vmul.f32 %v617, %v617
    %v650 = vmul.f32 %v618, %v618
    %v651 = vsub.f32 %v619, %v635
    %v652 = vsub.f32 %v620, %v636
    %v653 = vsub.f32 %v621, %v637
    %v654 = vsub.f32 %v622, %v638
    %v655 = vsub.f32 %v623, %v639
    %v656 = vsub.f32 %v624, %v640
    %v657 = vsub.f32 %v625, %v641
    %v658 = vsub.f32 %v626, %v642
    %v659 = vsub.f32 %v627, %v643
    %v660 = vsub.f32 %v628, %v644
    %v661 = vsub.f32 %v629, %v645
    %v662 = vsub.f32 %v630, %v646
    %v663 = vsub.f32 %v631, %v647
    %v664 = vsub.f32 %v632, %v648
    %v665 = vsub.f32 %v633, %v649
    %v666 = vsub.f32 %v634, %v650
    %v667 = vmax.f32 %v651, 0.0
    %v668 = vmax.f32 %v652, 0.0
    %v669 = vmax.f32 %v653, 0.0
    %v670 = vmax.f32 %v654, 0.0
    %v671 = vmax.f32 %v655, 0.0
    %v672 = vmax.f32 %v656, 0.0
    %v673 = vmax.f32 %v657, 0.0
    %v674 = vmax.f32 %v658, 0.0
    %v675 = vmax.f32 %v659, 0.0
    %v676 = vmax.f32 %v660, 0.0
    %v677 = vmax.f32 %v661, 0.0
    %v678 = vmax.f32 %v662, 0.0
    %v679 = vmax.f32 %v663, 0.0
    %v680 = vmax.f32 %v664, 0.0
    %v681 = vmax.f32 %v665, 0.0
    %v682 = vmax.f32 %v666, 0.0
    %v683 = vsub.f32 %v188, %v603
    %v684 = vsub.f32 %v190, %v604
    %v685 = vsub.f32 %v301, %v605
    %v686 = vsub.f32 %v303, %v606
    %v687 = vsub.f32 %v194, %v603
    %v688 = vsub.f32 %v196, %v604
    %v689 = vsub.f32 %v307, %v605
    %v690 = vsub.f32 %v309, %v606
    %v691 = vsub.f32 %v200, %v607
    %v692 = vsub.f32 %v202, %v608
    %v693 = vsub.f32 %v313, %v609
    %v694 = vsub.f32 %v315, %v610
    %v695 = vsub.f32 %v206, %v607
    %v696 = vsub.f32 %v208, %v608
    %v697 = vsub.f32 %v319, %v609
    %v698 = vsub.f32 %v321, %v610
    %v699 = vsub.f32 %v212, %v611
    %v700 = vsub.f32 %v214, %v612
    %v701 = vsub.f32 %v325, %v613
    %v702 = vsub.f32 %v327, %v614
    %v703 = vsub.f32 %v218, %v611
    %v704 = vsub.f32 %v220, %v612
    %v705 = vsub.f32 %v331, %v613
    %v706 = vsub.f32 %v333, %v614
    %v707 = vsub.f32 %v224, %v615
    %v708 = vsub.f32 %v226, %v616
    %v709 = vsub.f32 %v337, %v617
    %v710 = vsub.f32 %v339, %v618
    %v711 = vsub.f32 %v230, %v615
    %v712 = vsub.f32 %v232, %v616
    %v713 = vsub.f32 %v343, %v617
    %v714 = vsub.f32 %v345, %v618
    %v715 = vadd.f32 %v667, 1e-05
    %v716 = vadd.f32 %v668, 1e-05
    %v717 = vadd.f32 %v669, 1e-05
    %v718 = vadd.f32 %v670, 1e-05
    %v719 = vadd.f32 %v671, 1e-05
    %v720 = vadd.f32 %v672, 1e-05
    %v721 = vadd.f32 %v673, 1e-05
    %v722 = vadd.f32 %v674, 1e-05
    %v723 = vadd.f32 %v675, 1e-05
    %v724 = vadd.f32 %v676, 1e-05
    %v725 = vadd.f32 %v677, 1e-05
    %v726 = vadd.f32 %v678, 1e-05
    %v727 = vadd.f32 %v679, 1e-05
    %v728 = vadd.f32 %v680, 1e-05
    %v729 = vadd.f32 %v681, 1e-05
    %v730 = vadd.f32 %v682, 1e-05
    %v731 = vrsqrt.pop %v715
    %v732 = vrsqrt.pop %v716
    %v733 = vrsqrt.pop %v717
    %v734 = vrsqrt.pop %v718
    %v735 = vrsqrt.pop %v719
    %v736 = vrsqrt.pop %v720
    %v737 = vrsqrt.pop %v721
    %v738 = vrsqrt.pop %v722
    %v739 = vrsqrt.pop %v723
    %v740 = vrsqrt.pop %v724
    %v741 = vrsqrt.pop %v725
    %v742 = vrsqrt.pop %v726
    %v743 = vrsqrt.pop %v727
    %v744 = vrsqrt.pop %v728
    %v745 = vrsqrt.pop %v729
    %v746 = vrsqrt.pop %v730
    %v747 = vmul.f32 %v683, %v731
    %v748 = vmul.f32 %v684, %v732
    %v749 = vmul.f32 %v685, %v733
    %v750 = vmul.f32 %v686, %v734
    %v751 = vmul.f32 %v687, %v731
    %v752 = vmul.f32 %v688, %v732
    %v753 = vmul.f32 %v689, %v733
    %v754 = vmul.f32 %v690, %v734
    %v755 = vmul.f32 %v691, %v735
    %v756 = vmul.f32 %v692, %v736
    %v757 = vmul.f32 %v693, %v737
    %v758 = vmul.f32 %v694, %v738
    %v759 = vmul.f32 %v695, %v735
    %v760 = vmul.f32 %v696, %v736
    %v761 = vmul.f32 %v697, %v737
    %v762 = vmul.f32 %v698, %v738
    %v763 = vmul.f32 %v699, %v739
    %v764 = vmul.f32 %v700, %v740
    %v765 = vmul.f32 %v701, %v741
    %v766 = vmul.f32 %v702, %v742
    %v767 = vmul.f32 %v703, %v739
    %v768 = vmul.f32 %v704, %v740
    %v769 = vmul.f32 %v705, %v741
    %v770 = vmul.f32 %v706, %v742
    %v771 = vmul.f32 %v707, %v743
    %v772 = vmul.f32 %v708, %v744
    %v773 = vmul.f32 %v709, %v745
    %v774 = vmul.f32 %v710, %v746
    %v775 = vmul.f32 %v711, %v743
    %v776 = vmul.f32 %v712, %v744
    %v777 = vmul.f32 %v713, %v745
    %v778 = vmul.f32 %v714, %v746
    %v779 = vld [vmem:[%s2] sm:$0xf]
    %v781 = vlaneseq
    %v782 = vshrl.u32 %v781, 7
    %v783 = vsub.s32 0, %v782
    %v784 = vrot.slane %v779, %v783
    %v785 = vlaneseq
    %v786 = vshrl.u32 %v785, 7
    %v787 = vsub.s32 1, %v786
    %v788 = vrot.slane %v779, %v787
    %v789 = vlaneseq
    %v790 = vshrl.u32 %v789, 7
    %v791 = vsub.s32 2, %v790
    %v792 = vrot.slane %v779, %v791
    %v793 = vlaneseq
    %v794 = vshrl.u32 %v793, 7
    %v795 = vsub.s32 3, %v794
    %v796 = vrot.slane %v779, %v795
    %v801 = vmul.f32 %v747, %v784
    %v802 = vmul.f32 %v748, %v788
    %v803 = vmul.f32 %v749, %v792
    %v804 = vmul.f32 %v750, %v796
    %v805 = vmul.f32 %v751, %v784
    %v806 = vmul.f32 %v752, %v788
    %v807 = vmul.f32 %v753, %v792
    %v808 = vmul.f32 %v754, %v796
    %v809 = vmul.f32 %v755, %v784
    %v810 = vmul.f32 %v756, %v788
    %v811 = vmul.f32 %v757, %v792
    %v812 = vmul.f32 %v758, %v796
    %v813 = vmul.f32 %v759, %v784
    %v814 = vmul.f32 %v760, %v788
    %v815 = vmul.f32 %v761, %v792
    %v816 = vmul.f32 %v762, %v796
    %v817 = vmul.f32 %v763, %v784
    %v818 = vmul.f32 %v764, %v788
    %v819 = vmul.f32 %v765, %v792
    %v820 = vmul.f32 %v766, %v796
    %v821 = vmul.f32 %v767, %v784
    %v822 = vmul.f32 %v768, %v788
    %v823 = vmul.f32 %v769, %v792
    %v824 = vmul.f32 %v770, %v796
    %v825 = vmul.f32 %v771, %v784
    %v826 = vmul.f32 %v772, %v788
    %v827 = vmul.f32 %v773, %v792
    %v828 = vmul.f32 %v774, %v796
    %v829 = vmul.f32 %v775, %v784
    %v830 = vmul.f32 %v776, %v788
    %v831 = vmul.f32 %v777, %v792
    %v832 = vmul.f32 %v778, %v796
    %v833 = vld [vmem:[%s3] sm:$0xf]
    %v835 = vlaneseq
    %v836 = vshrl.u32 %v835, 7
    %v837 = vsub.s32 0, %v836
    %v838 = vrot.slane %v833, %v837
    %v839 = vlaneseq
    %v840 = vshrl.u32 %v839, 7
    %v841 = vsub.s32 1, %v840
    %v842 = vrot.slane %v833, %v841
    %v843 = vlaneseq
    %v844 = vshrl.u32 %v843, 7
    %v845 = vsub.s32 2, %v844
    %v846 = vrot.slane %v833, %v845
    %v847 = vlaneseq
    %v848 = vshrl.u32 %v847, 7
    %v849 = vsub.s32 3, %v848
    %v850 = vrot.slane %v833, %v849
    %v855 = vadd.f32 %v801, %v838
    %v856 = vadd.f32 %v802, %v842
    %v857 = vadd.f32 %v803, %v846
    %v858 = vadd.f32 %v804, %v850
    %v859 = vadd.f32 %v805, %v838
    %v860 = vadd.f32 %v806, %v842
    %v861 = vadd.f32 %v807, %v846
    %v862 = vadd.f32 %v808, %v850
    %v863 = vadd.f32 %v809, %v838
    %v864 = vadd.f32 %v810, %v842
    %v865 = vadd.f32 %v811, %v846
    %v866 = vadd.f32 %v812, %v850
    %v867 = vadd.f32 %v813, %v838
    %v868 = vadd.f32 %v814, %v842
    %v869 = vadd.f32 %v815, %v846
    %v870 = vadd.f32 %v816, %v850
    %v871 = vadd.f32 %v817, %v838
    %v872 = vadd.f32 %v818, %v842
    %v873 = vadd.f32 %v819, %v846
    %v874 = vadd.f32 %v820, %v850
    %v875 = vadd.f32 %v821, %v838
    %v876 = vadd.f32 %v822, %v842
    %v877 = vadd.f32 %v823, %v846
    %v878 = vadd.f32 %v824, %v850
    %v879 = vadd.f32 %v825, %v838
    %v880 = vadd.f32 %v826, %v842
    %v881 = vadd.f32 %v827, %v846
    %v882 = vadd.f32 %v828, %v850
    %v883 = vadd.f32 %v829, %v838
    %v884 = vadd.f32 %v830, %v842
    %v885 = vadd.f32 %v831, %v846
    %v886 = vadd.f32 %v832, %v850
    %v887 = vmax.f32 %v855, 0.0
    %v888 = vmax.f32 %v856, 0.0
    %v889 = vmax.f32 %v857, 0.0
    %v890 = vmax.f32 %v858, 0.0
    %v891 = vmax.f32 %v859, 0.0
    %v892 = vmax.f32 %v860, 0.0
    %v893 = vmax.f32 %v861, 0.0
    %v894 = vmax.f32 %v862, 0.0
    %v895 = vmax.f32 %v863, 0.0
    %v896 = vmax.f32 %v864, 0.0
    %v897 = vmax.f32 %v865, 0.0
    %v898 = vmax.f32 %v866, 0.0
    %v899 = vmax.f32 %v867, 0.0
    %v900 = vmax.f32 %v868, 0.0
    %v901 = vmax.f32 %v869, 0.0
    %v902 = vmax.f32 %v870, 0.0
    %v903 = vmax.f32 %v871, 0.0
    %v904 = vmax.f32 %v872, 0.0
    %v905 = vmax.f32 %v873, 0.0
    %v906 = vmax.f32 %v874, 0.0
    %v907 = vmax.f32 %v875, 0.0
    %v908 = vmax.f32 %v876, 0.0
    %v909 = vmax.f32 %v877, 0.0
    %v910 = vmax.f32 %v878, 0.0
    %v911 = vmax.f32 %v879, 0.0
    %v912 = vmax.f32 %v880, 0.0
    %v913 = vmax.f32 %v881, 0.0
    %v914 = vmax.f32 %v882, 0.0
    %v915 = vmax.f32 %v883, 0.0
    %v916 = vmax.f32 %v884, 0.0
    %v917 = vmax.f32 %v885, 0.0
    %v918 = vmax.f32 %v886, 0.0
    %v919 = vpack.c.bf16 %v891, %v887
    %v920 = vpack.c.bf16 %v892, %v888
    %v921 = vpack.c.bf16 %v893, %v889
    %v922 = vpack.c.bf16 %v894, %v890
    %v923 = vpack.c.bf16 %v899, %v895
    %v924 = vpack.c.bf16 %v900, %v896
    %v925 = vpack.c.bf16 %v901, %v897
    %v926 = vpack.c.bf16 %v902, %v898
    %v927 = vpack.c.bf16 %v907, %v903
    %v928 = vpack.c.bf16 %v908, %v904
    %v929 = vpack.c.bf16 %v909, %v905
    %v930 = vpack.c.bf16 %v910, %v906
    %v931 = vpack.c.bf16 %v915, %v911
    %v932 = vpack.c.bf16 %v916, %v912
    %v933 = vpack.c.bf16 %v917, %v913
    %v934 = vpack.c.bf16 %v918, %v914
    %v935 = vld [vmem:[#allocation5] sm:$0xff]
    %v936 = vld [vmem:[#allocation5 + $0x8] sm:$0xf]
    %v937 = vld [vmem:[#allocation5 + $0xc] sm:$0xff]
    %v938 = vld [vmem:[#allocation5 + $0x14] sm:$0xf]
    %v939 = vld [vmem:[#allocation5 + $0x18] sm:$0xff]
    %v940 = vld [vmem:[#allocation5 + $0x20] sm:$0xf]
    %v941 = vld [vmem:[#allocation5 + $0x24] sm:$0xff]
    %v942 = vld [vmem:[#allocation5 + $0x2c] sm:$0xf]
    %v943 = vld [vmem:[#allocation5 + $0x30] sm:$0xff]
    %v944 = vld [vmem:[#allocation5 + $0x38] sm:$0xf]
    %v945 = vld [vmem:[#allocation5 + $0x3c] sm:$0xff]
    %v946 = vld [vmem:[#allocation5 + $0x44] sm:$0xf]
    %v947 = vld [vmem:[#allocation5 + $0x48] sm:$0xff]
    %v948 = vld [vmem:[#allocation5 + $0x50] sm:$0xf]
    %v949 = vld [vmem:[#allocation5 + $0x54] sm:$0xff]
    %v950 = vld [vmem:[#allocation5 + $0x5c] sm:$0xf]
    %v951 = vld [vmem:[#allocation5 + $0x60] sm:$0xff]
    %v952 = vld [vmem:[#allocation5 + $0x68] sm:$0xf]
    %v953 = vld [vmem:[#allocation5 + $0x6c] sm:$0xff]
    %v954 = vld [vmem:[#allocation5 + $0x74] sm:$0xf]
    %v955 = vld [vmem:[#allocation5 + $0x78] sm:$0xff]
    %v956 = vld [vmem:[#allocation5 + $0x80] sm:$0xf]
    %v957 = vld [vmem:[#allocation5 + $0x84] sm:$0xff]
    %v958 = vld [vmem:[#allocation5 + $0x8c] sm:$0xf]
    %v959 = vld [vmem:[#allocation5 + $0x90] sm:$0xff]
    %v960 = vld [vmem:[#allocation5 + $0x98] sm:$0xf]
    %v961 = vld [vmem:[#allocation5 + $0x9c] sm:$0xff]
    %v962 = vld [vmem:[#allocation5 + $0xa4] sm:$0xf]
    %v963 = vld [vmem:[#allocation5 + $0xa8] sm:$0xff]
    %v964 = vld [vmem:[#allocation5 + $0xb0] sm:$0xf]
    %v965 = vld [vmem:[#allocation5 + $0xb4] sm:$0xff]
    %v966 = vld [vmem:[#allocation5 + $0xbc] sm:$0xf]
    %v967 = vld [vmem:[#allocation5 + $0xc0] sm:$0xff]
    %v968 = vld [vmem:[#allocation5 + $0xc8] sm:$0xf]
    %v969 = vld [vmem:[#allocation5 + $0xcc] sm:$0xff]
    %v970 = vld [vmem:[#allocation5 + $0xd4] sm:$0xf]
    %v971 = vld [vmem:[#allocation5 + $0xd8] sm:$0xff]
    %v972 = vld [vmem:[#allocation5 + $0xe0] sm:$0xf]
    %v973 = vld [vmem:[#allocation5 + $0xe4] sm:$0xff]
    %v974 = vld [vmem:[#allocation5 + $0xec] sm:$0xf]
    %v975 = vld [vmem:[#allocation5 + $0xf0] sm:$0xff]
    %v976 = vld [vmem:[#allocation5 + $0xf8] sm:$0xf]
    %v977 = vld [vmem:[#allocation5 + $0xfc] sm:$0xff]
    %v978 = vld [vmem:[#allocation5 + $0x104] sm:$0xf]
    %v979 = vld [vmem:[#allocation5 + $0x108] sm:$0xff]
    %v980 = vld [vmem:[#allocation5 + $0x110] sm:$0xf]
    %v981 = vld [vmem:[#allocation5 + $0x114] sm:$0xff]
    %v982 = vld [vmem:[#allocation5 + $0x11c] sm:$0xf]
    %v983 = vld [vmem:[#allocation5 + $0x120] sm:$0xff]
    %v984 = vld [vmem:[#allocation5 + $0x128] sm:$0xf]
    %v985 = vld [vmem:[#allocation5 + $0x12c] sm:$0xff]
    %v986 = vld [vmem:[#allocation5 + $0x134] sm:$0xf]
    %v987 = vld [vmem:[#allocation5 + $0x138] sm:$0xff]
    %v988 = vld [vmem:[#allocation5 + $0x140] sm:$0xf]
    %v989 = vld [vmem:[#allocation5 + $0x144] sm:$0xff]
    %v990 = vld [vmem:[#allocation5 + $0x14c] sm:$0xf]
    %v991 = vld [vmem:[#allocation5 + $0x150] sm:$0xff]
    %v992 = vld [vmem:[#allocation5 + $0x158] sm:$0xf]
    %v993 = vld [vmem:[#allocation5 + $0x15c] sm:$0xff]
    %v994 = vld [vmem:[#allocation5 + $0x164] sm:$0xf]
    %v995 = vld [vmem:[#allocation5 + $0x168] sm:$0xff]
    %v996 = vld [vmem:[#allocation5 + $0x170] sm:$0xf]
    %v997 = vld [vmem:[#allocation5 + $0x174] sm:$0xff]
    %v998 = vld [vmem:[#allocation5 + $0x17c] sm:$0xf]
    %v999 = vld [vmem:[#allocation5 + $0x180] sm:$0xff]
    %v1000 = vld [vmem:[#allocation5 + $0x188] sm:$0xf]
    %v1001 = vld [vmem:[#allocation5 + $0x18c] sm:$0xff]
    %v1002 = vld [vmem:[#allocation5 + $0x194] sm:$0xf]
    %v1003 = vld [vmem:[#allocation5 + $0x198] sm:$0xff]
    %v1004 = vld [vmem:[#allocation5 + $0x1a0] sm:$0xf]
    %v1005 = vld [vmem:[#allocation5 + $0x1a4] sm:$0xff]
    %v1006 = vld [vmem:[#allocation5 + $0x1ac] sm:$0xf]
    %v1007 = vld [vmem:[#allocation5 + $0x1b0] sm:$0xff]
    %v1008 = vld [vmem:[#allocation5 + $0x1b8] sm:$0xf]
    %v1009 = vld [vmem:[#allocation5 + $0x1bc] sm:$0xff]
    %v1010 = vld [vmem:[#allocation5 + $0x1c4] sm:$0xf]
    %v1011 = vld [vmem:[#allocation5 + $0x1c8] sm:$0xff]
    %v1012 = vld [vmem:[#allocation5 + $0x1d0] sm:$0xf]
    %v1013 = vld [vmem:[#allocation5 + $0x1d4] sm:$0xff]
    %v1014 = vld [vmem:[#allocation5 + $0x1dc] sm:$0xf]
    %v1015 = vld [vmem:[#allocation5 + $0x1e0] sm:$0xff]
    %v1016 = vld [vmem:[#allocation5 + $0x1e8] sm:$0xf]
    %v1017 = vld [vmem:[#allocation5 + $0x1ec] sm:$0xff]
    %v1018 = vld [vmem:[#allocation5 + $0x1f4] sm:$0xf]
    %v1019 = vld [vmem:[#allocation5 + $0x1f8] sm:$0xff]
    %v1020 = vld [vmem:[#allocation5 + $0x200] sm:$0xf]
    %v1021 = vld [vmem:[#allocation5 + $0x204] sm:$0xff]
    %v1022 = vld [vmem:[#allocation5 + $0x20c] sm:$0xf]
    %v1023 = vld [vmem:[#allocation5 + $0x210] sm:$0xff]
    %v1024 = vld [vmem:[#allocation5 + $0x218] sm:$0xf]
    %v1025 = vld [vmem:[#allocation5 + $0x21c] sm:$0xff]
    %v1026 = vld [vmem:[#allocation5 + $0x224] sm:$0xf]
    %v1027 = vld [vmem:[#allocation5 + $0x228] sm:$0xff]
    %v1028 = vld [vmem:[#allocation5 + $0x230] sm:$0xf]
    %v1029 = vld [vmem:[#allocation5 + $0x234] sm:$0xff]
    %v1030 = vld [vmem:[#allocation5 + $0x23c] sm:$0xf]
    %v1031 = vld [vmem:[#allocation5 + $0x240] sm:$0xff]
    %v1032 = vld [vmem:[#allocation5 + $0x248] sm:$0xf]
    %v1033 = vld [vmem:[#allocation5 + $0x24c] sm:$0xff]
    %v1034 = vld [vmem:[#allocation5 + $0x254] sm:$0xf]
    %v1035 = vld [vmem:[#allocation5 + $0x258] sm:$0xff]
    %v1036 = vld [vmem:[#allocation5 + $0x260] sm:$0xf]
    %v1037 = vld [vmem:[#allocation5 + $0x264] sm:$0xff]
    %v1038 = vld [vmem:[#allocation5 + $0x26c] sm:$0xf]
    %v1039 = vld [vmem:[#allocation5 + $0x270] sm:$0xff]
    %v1040 = vld [vmem:[#allocation5 + $0x278] sm:$0xf]
    %v1041 = vld [vmem:[#allocation5 + $0x27c] sm:$0xff]
    %v1042 = vld [vmem:[#allocation5 + $0x284] sm:$0xf]
    %v1043 = vld [vmem:[#allocation5 + $0x288] sm:$0xff]
    %v1044 = vld [vmem:[#allocation5 + $0x290] sm:$0xf]
    %v1045 = vld [vmem:[#allocation5 + $0x294] sm:$0xff]
    %v1046 = vld [vmem:[#allocation5 + $0x29c] sm:$0xf]
    %v1047 = vld [vmem:[#allocation5 + $0x2a0] sm:$0xff]
    %v1048 = vld [vmem:[#allocation5 + $0x2a8] sm:$0xf]
    %v1049 = vld [vmem:[#allocation5 + $0x2ac] sm:$0xff]
    %v1050 = vld [vmem:[#allocation5 + $0x2b4] sm:$0xf]
    %v1051 = vld [vmem:[#allocation5 + $0x2b8] sm:$0xff]
    %v1052 = vld [vmem:[#allocation5 + $0x2c0] sm:$0xf]
    %v1053 = vld [vmem:[#allocation5 + $0x2c4] sm:$0xff]
    %v1054 = vld [vmem:[#allocation5 + $0x2cc] sm:$0xf]
    %v1055 = vld [vmem:[#allocation5 + $0x2d0] sm:$0xff]
    %v1056 = vld [vmem:[#allocation5 + $0x2d8] sm:$0xf]
    %v1057 = vld [vmem:[#allocation5 + $0x2dc] sm:$0xff]
    %v1058 = vld [vmem:[#allocation5 + $0x2e4] sm:$0xf]
    %v1059 = vld [vmem:[#allocation5 + $0x2e8] sm:$0xff]
    %v1060 = vld [vmem:[#allocation5 + $0x2f0] sm:$0xf]
    %v1061 = vld [vmem:[#allocation5 + $0x2f4] sm:$0xff]
    %v1062 = vld [vmem:[#allocation5 + $0x2fc] sm:$0xf]
    %v1063 = vld [vmem:[%s5] sm:$0x7]
    %v1065 = vlaneseq
    %v1066 = vshrl.u32 %v1065, 7
    %v1067 = vsub.s32 0, %v1066
    %v1068 = vrot.slane %v1063, %v1067
    %v1069 = vlaneseq
    %v1070 = vshrl.u32 %v1069, 7
    %v1071 = vsub.s32 1, %v1070
    %v1072 = vrot.slane %v1063, %v1071
    %v1073 = vlaneseq
    %v1074 = vshrl.u32 %v1073, 7
    %v1075 = vsub.s32 2, %v1074
    %v1076 = vrot.slane %v1063, %v1075
    %v1208 = vunpack.c.l.b16 %v935
    %v1209 = vunpack.c.h.b16 %v935
    %v1210 = vunpack.c.l.b16 %v936
    %v1211 = vunpack.c.l.b16 %v937
    %v1212 = vunpack.c.h.b16 %v937
    %v1213 = vunpack.c.l.b16 %v938
    %v1214 = vunpack.c.l.b16 %v939
    %v1215 = vunpack.c.h.b16 %v939
    %v1216 = vunpack.c.l.b16 %v940
    %v1217 = vunpack.c.l.b16 %v941
    %v1218 = vunpack.c.h.b16 %v941
    %v1219 = vunpack.c.l.b16 %v942
    %v1220 = vunpack.c.l.b16 %v943
    %v1221 = vunpack.c.h.b16 %v943
    %v1222 = vunpack.c.l.b16 %v944
    %v1223 = vunpack.c.l.b16 %v945
    %v1224 = vunpack.c.h.b16 %v945
    %v1225 = vunpack.c.l.b16 %v946
    %v1226 = vunpack.c.l.b16 %v947
    %v1227 = vunpack.c.h.b16 %v947
    %v1228 = vunpack.c.l.b16 %v948
    %v1229 = vunpack.c.l.b16 %v949
    %v1230 = vunpack.c.h.b16 %v949
    %v1231 = vunpack.c.l.b16 %v950
    %v1232 = vunpack.c.l.b16 %v951
    %v1233 = vunpack.c.h.b16 %v951
    %v1234 = vunpack.c.l.b16 %v952
    %v1235 = vunpack.c.l.b16 %v953
    %v1236 = vunpack.c.h.b16 %v953
    %v1237 = vunpack.c.l.b16 %v954
    %v1238 = vunpack.c.l.b16 %v955
    %v1239 = vunpack.c.h.b16 %v955
    %v1240 = vunpack.c.l.b16 %v956
    %v1241 = vunpack.c.l.b16 %v957
    %v1242 = vunpack.c.h.b16 %v957
    %v1243 = vunpack.c.l.b16 %v958
    %v1244 = vunpack.c.l.b16 %v959
    %v1245 = vunpack.c.h.b16 %v959
    %v1246 = vunpack.c.l.b16 %v960
    %v1247 = vunpack.c.l.b16 %v961
    %v1248 = vunpack.c.h.b16 %v961
    %v1249 = vunpack.c.l.b16 %v962
    %v1250 = vunpack.c.l.b16 %v963
    %v1251 = vunpack.c.h.b16 %v963
    %v1252 = vunpack.c.l.b16 %v964
    %v1253 = vunpack.c.l.b16 %v965
    %v1254 = vunpack.c.h.b16 %v965
    %v1255 = vunpack.c.l.b16 %v966
    %v1256 = vunpack.c.l.b16 %v967
    %v1257 = vunpack.c.h.b16 %v967
    %v1258 = vunpack.c.l.b16 %v968
    %v1259 = vunpack.c.l.b16 %v969
    %v1260 = vunpack.c.h.b16 %v969
    %v1261 = vunpack.c.l.b16 %v970
    %v1262 = vunpack.c.l.b16 %v971
    %v1263 = vunpack.c.h.b16 %v971
    %v1264 = vunpack.c.l.b16 %v972
    %v1265 = vunpack.c.l.b16 %v973
    %v1266 = vunpack.c.h.b16 %v973
    %v1267 = vunpack.c.l.b16 %v974
    %v1268 = vunpack.c.l.b16 %v975
    %v1269 = vunpack.c.h.b16 %v975
    %v1270 = vunpack.c.l.b16 %v976
    %v1271 = vunpack.c.l.b16 %v977
    %v1272 = vunpack.c.h.b16 %v977
    %v1273 = vunpack.c.l.b16 %v978
    %v1274 = vunpack.c.l.b16 %v979
    %v1275 = vunpack.c.h.b16 %v979
    %v1276 = vunpack.c.l.b16 %v980
    %v1277 = vunpack.c.l.b16 %v981
    %v1278 = vunpack.c.h.b16 %v981
    %v1279 = vunpack.c.l.b16 %v982
    %v1280 = vunpack.c.l.b16 %v983
    %v1281 = vunpack.c.h.b16 %v983
    %v1282 = vunpack.c.l.b16 %v984
    %v1283 = vunpack.c.l.b16 %v985
    %v1284 = vunpack.c.h.b16 %v985
    %v1285 = vunpack.c.l.b16 %v986
    %v1286 = vunpack.c.l.b16 %v987
    %v1287 = vunpack.c.h.b16 %v987
    %v1288 = vunpack.c.l.b16 %v988
    %v1289 = vunpack.c.l.b16 %v989
    %v1290 = vunpack.c.h.b16 %v989
    %v1291 = vunpack.c.l.b16 %v990
    %v1292 = vunpack.c.l.b16 %v991
    %v1293 = vunpack.c.h.b16 %v991
    %v1294 = vunpack.c.l.b16 %v992
    %v1295 = vunpack.c.l.b16 %v993
    %v1296 = vunpack.c.h.b16 %v993
    %v1297 = vunpack.c.l.b16 %v994
    %v1298 = vunpack.c.l.b16 %v995
    %v1299 = vunpack.c.h.b16 %v995
    %v1300 = vunpack.c.l.b16 %v996
    %v1301 = vunpack.c.l.b16 %v997
    %v1302 = vunpack.c.h.b16 %v997
    %v1303 = vunpack.c.l.b16 %v998
    %v1304 = vunpack.c.l.b16 %v999
    %v1305 = vunpack.c.h.b16 %v999
    %v1306 = vunpack.c.l.b16 %v1000
    %v1307 = vunpack.c.l.b16 %v1001
    %v1308 = vunpack.c.h.b16 %v1001
    %v1309 = vunpack.c.l.b16 %v1002
    %v1310 = vunpack.c.l.b16 %v1003
    %v1311 = vunpack.c.h.b16 %v1003
    %v1312 = vunpack.c.l.b16 %v1004
    %v1313 = vunpack.c.l.b16 %v1005
    %v1314 = vunpack.c.h.b16 %v1005
    %v1315 = vunpack.c.l.b16 %v1006
    %v1316 = vunpack.c.l.b16 %v1007
    %v1317 = vunpack.c.h.b16 %v1007
    %v1318 = vunpack.c.l.b16 %v1008
    %v1319 = vunpack.c.l.b16 %v1009
    %v1320 = vunpack.c.h.b16 %v1009
    %v1321 = vunpack.c.l.b16 %v1010
    %v1322 = vunpack.c.l.b16 %v1011
    %v1323 = vunpack.c.h.b16 %v1011
    %v1324 = vunpack.c.l.b16 %v1012
    %v1325 = vunpack.c.l.b16 %v1013
    %v1326 = vunpack.c.h.b16 %v1013
    %v1327 = vunpack.c.l.b16 %v1014
    %v1328 = vunpack.c.l.b16 %v1015
    %v1329 = vunpack.c.h.b16 %v1015
    %v1330 = vunpack.c.l.b16 %v1016
    %v1331 = vunpack.c.l.b16 %v1017
    %v1332 = vunpack.c.h.b16 %v1017
    %v1333 = vunpack.c.l.b16 %v1018
    %v1334 = vunpack.c.l.b16 %v1019
    %v1335 = vunpack.c.h.b16 %v1019
    %v1336 = vunpack.c.l.b16 %v1020
    %v1337 = vunpack.c.l.b16 %v1021
    %v1338 = vunpack.c.h.b16 %v1021
    %v1339 = vunpack.c.l.b16 %v1022
    %v1340 = vunpack.c.l.b16 %v1023
    %v1341 = vunpack.c.h.b16 %v1023
    %v1342 = vunpack.c.l.b16 %v1024
    %v1343 = vunpack.c.l.b16 %v1025
    %v1344 = vunpack.c.h.b16 %v1025
    %v1345 = vunpack.c.l.b16 %v1026
    %v1346 = vunpack.c.l.b16 %v1027
    %v1347 = vunpack.c.h.b16 %v1027
    %v1348 = vunpack.c.l.b16 %v1028
    %v1349 = vunpack.c.l.b16 %v1029
    %v1350 = vunpack.c.h.b16 %v1029
    %v1351 = vunpack.c.l.b16 %v1030
    %v1352 = vunpack.c.l.b16 %v1031
    %v1353 = vunpack.c.h.b16 %v1031
    %v1354 = vunpack.c.l.b16 %v1032
    %v1355 = vunpack.c.l.b16 %v1033
    %v1356 = vunpack.c.h.b16 %v1033
    %v1357 = vunpack.c.l.b16 %v1034
    %v1358 = vunpack.c.l.b16 %v1035
    %v1359 = vunpack.c.h.b16 %v1035
    %v1360 = vunpack.c.l.b16 %v1036
    %v1361 = vunpack.c.l.b16 %v1037
    %v1362 = vunpack.c.h.b16 %v1037
    %v1363 = vunpack.c.l.b16 %v1038
    %v1364 = vunpack.c.l.b16 %v1039
    %v1365 = vunpack.c.h.b16 %v1039
    %v1366 = vunpack.c.l.b16 %v1040
    %v1367 = vunpack.c.l.b16 %v1041
    %v1368 = vunpack.c.h.b16 %v1041
    %v1369 = vunpack.c.l.b16 %v1042
    %v1370 = vunpack.c.l.b16 %v1043
    %v1371 = vunpack.c.h.b16 %v1043
    %v1372 = vunpack.c.l.b16 %v1044
    %v1373 = vunpack.c.l.b16 %v1045
    %v1374 = vunpack.c.h.b16 %v1045
    %v1375 = vunpack.c.l.b16 %v1046
    %v1376 = vunpack.c.l.b16 %v1047
    %v1377 = vunpack.c.h.b16 %v1047
    %v1378 = vunpack.c.l.b16 %v1048
    %v1379 = vunpack.c.l.b16 %v1049
    %v1380 = vunpack.c.h.b16 %v1049
    %v1381 = vunpack.c.l.b16 %v1050
    %v1382 = vunpack.c.l.b16 %v1051
    %v1383 = vunpack.c.h.b16 %v1051
    %v1384 = vunpack.c.l.b16 %v1052
    %v1385 = vunpack.c.l.b16 %v1053
    %v1386 = vunpack.c.h.b16 %v1053
    %v1387 = vunpack.c.l.b16 %v1054
    %v1388 = vunpack.c.l.b16 %v1055
    %v1389 = vunpack.c.h.b16 %v1055
    %v1390 = vunpack.c.l.b16 %v1056
    %v1391 = vunpack.c.l.b16 %v1057
    %v1392 = vunpack.c.h.b16 %v1057
    %v1393 = vunpack.c.l.b16 %v1058
    %v1394 = vunpack.c.l.b16 %v1059
    %v1395 = vunpack.c.h.b16 %v1059
    %v1396 = vunpack.c.l.b16 %v1060
    %v1397 = vunpack.c.l.b16 %v1061
    %v1398 = vunpack.c.h.b16 %v1061
    %v1399 = vunpack.c.l.b16 %v1062
    %v1400 = vpack.c.b16 %v1211, %v1208
    %v1401 = vpack.c.b16 %v1212, %v1209
    %v1402 = vpack.c.b16 %v1213, %v1210
    %v1403 = vpack.c.b16 %v1217, %v1214
    %v1404 = vpack.c.b16 %v1218, %v1215
    %v1405 = vpack.c.b16 %v1219, %v1216
    %v1406 = vpack.c.b16 %v1223, %v1220
    %v1407 = vpack.c.b16 %v1224, %v1221
    %v1408 = vpack.c.b16 %v1225, %v1222
    %v1409 = vpack.c.b16 %v1229, %v1226
    %v1410 = vpack.c.b16 %v1230, %v1227
    %v1411 = vpack.c.b16 %v1231, %v1228
    %v1412 = vpack.c.b16 %v1235, %v1232
    %v1413 = vpack.c.b16 %v1236, %v1233
    %v1414 = vpack.c.b16 %v1237, %v1234
    %v1415 = vpack.c.b16 %v1241, %v1238
    %v1416 = vpack.c.b16 %v1242, %v1239
    %v1417 = vpack.c.b16 %v1243, %v1240
    %v1418 = vpack.c.b16 %v1247, %v1244
    %v1419 = vpack.c.b16 %v1248, %v1245
    %v1420 = vpack.c.b16 %v1249, %v1246
    %v1421 = vpack.c.b16 %v1253, %v1250
    %v1422 = vpack.c.b16 %v1254, %v1251
    %v1423 = vpack.c.b16 %v1255, %v1252
    %v1424 = vpack.c.b16 %v1259, %v1256
    %v1425 = vpack.c.b16 %v1260, %v1257
    %v1426 = vpack.c.b16 %v1261, %v1258
    %v1427 = vpack.c.b16 %v1265, %v1262
    %v1428 = vpack.c.b16 %v1266, %v1263
    %v1429 = vpack.c.b16 %v1267, %v1264
    %v1430 = vpack.c.b16 %v1271, %v1268
    %v1431 = vpack.c.b16 %v1272, %v1269
    %v1432 = vpack.c.b16 %v1273, %v1270
    %v1433 = vpack.c.b16 %v1277, %v1274
    %v1434 = vpack.c.b16 %v1278, %v1275
    %v1435 = vpack.c.b16 %v1279, %v1276
    %v1436 = vpack.c.b16 %v1283, %v1280
    %v1437 = vpack.c.b16 %v1284, %v1281
    %v1438 = vpack.c.b16 %v1285, %v1282
    %v1439 = vpack.c.b16 %v1289, %v1286
    %v1440 = vpack.c.b16 %v1290, %v1287
    %v1441 = vpack.c.b16 %v1291, %v1288
    %v1442 = vpack.c.b16 %v1295, %v1292
    %v1443 = vpack.c.b16 %v1296, %v1293
    %v1444 = vpack.c.b16 %v1297, %v1294
    %v1445 = vpack.c.b16 %v1301, %v1298
    %v1446 = vpack.c.b16 %v1302, %v1299
    %v1447 = vpack.c.b16 %v1303, %v1300
    %v1448 = vpack.c.b16 %v1307, %v1304
    %v1449 = vpack.c.b16 %v1308, %v1305
    %v1450 = vpack.c.b16 %v1309, %v1306
    %v1451 = vpack.c.b16 %v1313, %v1310
    %v1452 = vpack.c.b16 %v1314, %v1311
    %v1453 = vpack.c.b16 %v1315, %v1312
    %v1454 = vpack.c.b16 %v1319, %v1316
    %v1455 = vpack.c.b16 %v1320, %v1317
    %v1456 = vpack.c.b16 %v1321, %v1318
    %v1457 = vpack.c.b16 %v1325, %v1322
    %v1458 = vpack.c.b16 %v1326, %v1323
    %v1459 = vpack.c.b16 %v1327, %v1324
    %v1460 = vpack.c.b16 %v1331, %v1328
    %v1461 = vpack.c.b16 %v1332, %v1329
    %v1462 = vpack.c.b16 %v1333, %v1330
    %v1463 = vpack.c.b16 %v1337, %v1334
    %v1464 = vpack.c.b16 %v1338, %v1335
    %v1465 = vpack.c.b16 %v1339, %v1336
    %v1466 = vpack.c.b16 %v1343, %v1340
    %v1467 = vpack.c.b16 %v1344, %v1341
    %v1468 = vpack.c.b16 %v1345, %v1342
    %v1469 = vpack.c.b16 %v1349, %v1346
    %v1470 = vpack.c.b16 %v1350, %v1347
    %v1471 = vpack.c.b16 %v1351, %v1348
    %v1472 = vpack.c.b16 %v1355, %v1352
    %v1473 = vpack.c.b16 %v1356, %v1353
    %v1474 = vpack.c.b16 %v1357, %v1354
    %v1475 = vpack.c.b16 %v1361, %v1358
    %v1476 = vpack.c.b16 %v1362, %v1359
    %v1477 = vpack.c.b16 %v1363, %v1360
    %v1478 = vpack.c.b16 %v1367, %v1364
    %v1479 = vpack.c.b16 %v1368, %v1365
    %v1480 = vpack.c.b16 %v1369, %v1366
    %v1481 = vpack.c.b16 %v1373, %v1370
    %v1482 = vpack.c.b16 %v1374, %v1371
    %v1483 = vpack.c.b16 %v1375, %v1372
    %v1484 = vpack.c.b16 %v1379, %v1376
    %v1485 = vpack.c.b16 %v1380, %v1377
    %v1486 = vpack.c.b16 %v1381, %v1378
    %v1487 = vpack.c.b16 %v1385, %v1382
    %v1488 = vpack.c.b16 %v1386, %v1383
    %v1489 = vpack.c.b16 %v1387, %v1384
    %v1490 = vpack.c.b16 %v1391, %v1388
    %v1491 = vpack.c.b16 %v1392, %v1389
    %v1492 = vpack.c.b16 %v1393, %v1390
    %v1493 = vpack.c.b16 %v1397, %v1394
    %v1494 = vpack.c.b16 %v1398, %v1395
    %v1495 = vpack.c.b16 %v1399, %v1396
    %1592 = vmatprep.subr.bf16.mxu0 %v1422
    %1593 = vmatpush1.bf16.msra.mxu0 %v1421
    %1594 = vmatprep.subr.bf16.mxu0 %v1419
    %1595 = vmatpush1.bf16.msra.mxu0 %v1418
    %1596 = vmatprep.subr.bf16.mxu0 %v1416
    %1597 = vmatpush1.bf16.msra.mxu0 %v1415
    %1598 = vmatprep.subr.bf16.mxu0 %v1413
    %1599 = vmatpush1.bf16.msra.mxu0 %v1412
    %1600 = vmatprep.subr.bf16.mxu0 %v1410
    %1601 = vmatpush1.bf16.msra.mxu0 %v1409
    %1602 = vmatprep.subr.bf16.mxu0 %v1407
    %1603 = vmatpush1.bf16.msra.mxu0 %v1406
    %1604 = vmatprep.subr.bf16.mxu0 %v1404
    %1605 = vmatpush1.bf16.msra.mxu0 %v1403
    %1606 = vmatprep.subr.bf16.mxu0 %v1401
    %1607 = vmatpush1.bf16.msra.mxu0 %v1400
    %1608 = vmatprep.subr.bf16.mxu0 %v1446
    %1609 = vmatpush2.bf16.msra.mxu0 %v1445
    %1610 = vmatprep.subr.bf16.mxu0 %v1443
    %1611 = vmatpush2.bf16.msra.mxu0 %v1442
    %1612 = vmatprep.subr.bf16.mxu0 %v1440
    %1613 = vmatpush2.bf16.msra.mxu0 %v1439
    %1614 = vmatprep.subr.bf16.mxu0 %v1437
    %1615 = vmatpush2.bf16.msra.mxu0 %v1436
    %1616 = vmatprep.subr.bf16.mxu0 %v1434
    %1617 = vmatpush2.bf16.msra.mxu0 %v1433
    %1618 = vmatprep.subr.bf16.mxu0 %v1431
    %1619 = vmatpush2.bf16.msra.mxu0 %v1430
    %1620 = vmatprep.subr.bf16.mxu0 %v1428
    %1621 = vmatpush2.bf16.msra.mxu0 %v1427
    %1622 = vmatprep.subr.bf16.mxu0 %v1425
    %1623 = vmatpush2.bf16.msra.mxu0 %v1424
    %1624 = vmatprep.mubr.bf16.mxu0 %v920
    %1625 = vmatmul.mubr.bf16.gmra.mxu0 %v919
    %v1626 = vpop.f32.mrf.mxu0
    %v1627 = vadd.f32 %v1068, %v1626
    %v1628 = vpop.f32.mrf.mxu0
    %v1629 = vadd.f32 %v1072, %v1628
    %v1630 = vpop.f32.mrf.mxu0
    %v1631 = vadd.f32 %v1068, %v1630
    %v1632 = vpop.f32.mrf.mxu0
    %v1633 = vadd.f32 %v1072, %v1632
    %1634 = vmatprep.mubr.bf16.mxu0 %v924
    %1635 = vmatmul.mubr.bf16.gmra.mxu0 %v923
    %v1636 = vpop.f32.mrf.mxu0
    %v1637 = vadd.f32 %v1068, %v1636
    %v1638 = vpop.f32.mrf.mxu0
    %v1639 = vadd.f32 %v1072, %v1638
    %v1640 = vpop.f32.mrf.mxu0
    %v1641 = vadd.f32 %v1068, %v1640
    %v1642 = vpop.f32.mrf.mxu0
    %v1643 = vadd.f32 %v1072, %v1642
    %1644 = vmatprep.mubr.bf16.mxu0 %v928
    %1645 = vmatmul.mubr.bf16.gmra.mxu0 %v927
    %v1646 = vpop.f32.mrf.mxu0
    %v1647 = vadd.f32 %v1068, %v1646
    %v1648 = vpop.f32.mrf.mxu0
    %v1649 = vadd.f32 %v1072, %v1648
    %v1650 = vpop.f32.mrf.mxu0
    %v1651 = vadd.f32 %v1068, %v1650
    %v1652 = vpop.f32.mrf.mxu0
    %v1653 = vadd.f32 %v1072, %v1652
    %1654 = vmatprep.mubr.bf16.mxu0 %v932
    %1655 = vmatmul.mubr.bf16.gmra.mxu0 %v931
    %v1656 = vpop.f32.mrf.mxu0
    %v1657 = vadd.f32 %v1068, %v1656
    %v1658 = vpop.f32.mrf.mxu0
    %v1659 = vadd.f32 %v1072, %v1658
    %v1660 = vpop.f32.mrf.mxu0
    %v1661 = vadd.f32 %v1068, %v1660
    %v1662 = vpop.f32.mrf.mxu0
    %v1663 = vadd.f32 %v1072, %v1662
    %1664 = vdwg.mxu0
    %1665 = vmatprep.subr.bf16.mxu0 %v1470
    %1666 = vmatpush1.bf16.msra.mxu0 %v1469
    %1667 = vmatprep.subr.bf16.mxu0 %v1467
    %1668 = vmatpush1.bf16.msra.mxu0 %v1466
    %1669 = vmatprep.subr.bf16.mxu0 %v1464
    %1670 = vmatpush1.bf16.msra.mxu0 %v1463
    %1671 = vmatprep.subr.bf16.mxu0 %v1461
    %1672 = vmatpush1.bf16.msra.mxu0 %v1460
    %1673 = vmatprep.subr.bf16.mxu0 %v1458
    %1674 = vmatpush1.bf16.msra.mxu0 %v1457
    %1675 = vmatprep.subr.bf16.mxu0 %v1455
    %1676 = vmatpush1.bf16.msra.mxu0 %v1454
    %1677 = vmatprep.subr.bf16.mxu0 %v1452
    %1678 = vmatpush1.bf16.msra.mxu0 %v1451
    %1679 = vmatprep.subr.bf16.mxu0 %v1449
    %1680 = vmatpush1.bf16.msra.mxu0 %v1448
    %1681 = vmatprep.subr.bf16.mxu0 %v1494
    %1682 = vmatpush2.bf16.msra.mxu0 %v1493
    %1683 = vmatprep.subr.bf16.mxu0 %v1491
    %1684 = vmatpush2.bf16.msra.mxu0 %v1490
    %1685 = vmatprep.subr.bf16.mxu0 %v1488
    %1686 = vmatpush2.bf16.msra.mxu0 %v1487
    %1687 = vmatprep.subr.bf16.mxu0 %v1485
    %1688 = vmatpush2.bf16.msra.mxu0 %v1484
    %1689 = vmatprep.subr.bf16.mxu0 %v1482
    %1690 = vmatpush2.bf16.msra.mxu0 %v1481
    %1691 = vmatprep.subr.bf16.mxu0 %v1479
    %1692 = vmatpush2.bf16.msra.mxu0 %v1478
    %1693 = vmatprep.subr.bf16.mxu0 %v1476
    %1694 = vmatpush2.bf16.msra.mxu0 %v1475
    %1695 = vmatprep.subr.bf16.mxu0 %v1473
    %1696 = vmatpush2.bf16.msra.mxu0 %v1472
    %1697 = vmatprep.mubr.bf16.mxu0 %v922
    %1698 = vmatmul.mubr.bf16.gmra.mxu0 %v921
    %v1699 = vpop.f32.mrf.mxu0
    %v1700 = vadd.f32 %v1627, %v1699
    %v1701 = vpop.f32.mrf.mxu0
    %v1702 = vadd.f32 %v1629, %v1701
    %v1703 = vpop.f32.mrf.mxu0
    %v1704 = vadd.f32 %v1631, %v1703
    %v1705 = vpop.f32.mrf.mxu0
    %v1706 = vadd.f32 %v1633, %v1705
    %1707 = vmatprep.mubr.bf16.mxu0 %v926
    %1708 = vmatmul.mubr.bf16.gmra.mxu0 %v925
    %v1709 = vpop.f32.mrf.mxu0
    %v1710 = vadd.f32 %v1637, %v1709
    %v1711 = vpop.f32.mrf.mxu0
    %v1712 = vadd.f32 %v1639, %v1711
    %v1713 = vpop.f32.mrf.mxu0
    %v1714 = vadd.f32 %v1641, %v1713
    %v1715 = vpop.f32.mrf.mxu0
    %v1716 = vadd.f32 %v1643, %v1715
    %1717 = vmatprep.mubr.bf16.mxu0 %v930
    %1718 = vmatmul.mubr.bf16.gmra.mxu0 %v929
    %v1719 = vpop.f32.mrf.mxu0
    %v1720 = vadd.f32 %v1647, %v1719
    %v1721 = vpop.f32.mrf.mxu0
    %v1722 = vadd.f32 %v1649, %v1721
    %v1723 = vpop.f32.mrf.mxu0
    %v1724 = vadd.f32 %v1651, %v1723
    %v1725 = vpop.f32.mrf.mxu0
    %v1726 = vadd.f32 %v1653, %v1725
    %1727 = vmatprep.mubr.bf16.mxu0 %v934
    %1728 = vmatmul.mubr.bf16.gmra.mxu0 %v933
    %v1729 = vpop.f32.mrf.mxu0
    %v1730 = vadd.f32 %v1657, %v1729
    %v1731 = vpop.f32.mrf.mxu0
    %v1732 = vadd.f32 %v1659, %v1731
    %v1733 = vpop.f32.mrf.mxu0
    %v1734 = vadd.f32 %v1661, %v1733
    %v1735 = vpop.f32.mrf.mxu0
    %v1736 = vadd.f32 %v1663, %v1735
    %1737 = vdwg.mxu0
    %1738 = vmatprep.subr.bf16.mxu0 0
    %1739 = vmatpush1.bf16.msra.mxu0 %v1423
    %1740 = vmatprep.subr.bf16.mxu0 0
    %1741 = vmatpush1.bf16.msra.mxu0 %v1420
    %1742 = vmatprep.subr.bf16.mxu0 0
    %1743 = vmatpush1.bf16.msra.mxu0 %v1417
    %1744 = vmatprep.subr.bf16.mxu0 0
    %1745 = vmatpush1.bf16.msra.mxu0 %v1414
    %1746 = vmatprep.subr.bf16.mxu0 0
    %1747 = vmatpush1.bf16.msra.mxu0 %v1411
    %1748 = vmatprep.subr.bf16.mxu0 0
    %1749 = vmatpush1.bf16.msra.mxu0 %v1408
    %1750 = vmatprep.subr.bf16.mxu0 0
    %1751 = vmatpush1.bf16.msra.mxu0 %v1405
    %1752 = vmatprep.subr.bf16.mxu0 0
    %1753 = vmatpush1.bf16.msra.mxu0 %v1402
    %1754 = vmatprep.subr.bf16.mxu0 0
    %1755 = vmatpush2.bf16.msra.mxu0 %v1447
    %1756 = vmatprep.subr.bf16.mxu0 0
    %1757 = vmatpush2.bf16.msra.mxu0 %v1444
    %1758 = vmatprep.subr.bf16.mxu0 0
    %1759 = vmatpush2.bf16.msra.mxu0 %v1441
    %1760 = vmatprep.subr.bf16.mxu0 0
    %1761 = vmatpush2.bf16.msra.mxu0 %v1438
    %1762 = vmatprep.subr.bf16.mxu0 0
    %1763 = vmatpush2.bf16.msra.mxu0 %v1435
    %1764 = vmatprep.subr.bf16.mxu0 0
    %1765 = vmatpush2.bf16.msra.mxu0 %v1432
    %1766 = vmatprep.subr.bf16.mxu0 0
    %1767 = vmatpush2.bf16.msra.mxu0 %v1429
    %1768 = vmatprep.subr.bf16.mxu0 0
    %1769 = vmatpush2.bf16.msra.mxu0 %v1426
    %1770 = vmatprep.mubr.bf16.mxu0 %v920
    %1771 = vmatmul.mubr.bf16.gmra.mxu0 %v919
    %v1772 = vpop.f32.mrf.mxu0
    %v1773 = vadd.f32 %v1076, %v1772
    %v1774 = vpop.f32.mrf.mxu0
    %v1775 = vpop.f32.mrf.mxu0
    %v1776 = vadd.f32 %v1076, %v1775
    %v1777 = vpop.f32.mrf.mxu0
    %1778 = vmatprep.mubr.bf16.mxu0 %v924
    %1779 = vmatmul.mubr.bf16.gmra.mxu0 %v923
    %v1780 = vpop.f32.mrf.mxu0
    %v1781 = vadd.f32 %v1076, %v1780
    %v1782 = vpop.f32.mrf.mxu0
    %v1783 = vpop.f32.mrf.mxu0
    %v1784 = vadd.f32 %v1076, %v1783
    %v1785 = vpop.f32.mrf.mxu0
    %1786 = vmatprep.mubr.bf16.mxu0 %v928
    %1787 = vmatmul.mubr.bf16.gmra.mxu0 %v927
    %v1788 = vpop.f32.mrf.mxu0
    %v1789 = vadd.f32 %v1076, %v1788
    %v1790 = vpop.f32.mrf.mxu0
    %v1791 = vpop.f32.mrf.mxu0
    %v1792 = vadd.f32 %v1076, %v1791
    %v1793 = vpop.f32.mrf.mxu0
    %1794 = vmatprep.mubr.bf16.mxu0 %v932
    %1795 = vmatmul.mubr.bf16.gmra.mxu0 %v931
    %v1796 = vpop.f32.mrf.mxu0
    %v1797 = vadd.f32 %v1076, %v1796
    %v1798 = vpop.f32.mrf.mxu0
    %v1799 = vpop.f32.mrf.mxu0
    %v1800 = vadd.f32 %v1076, %v1799
    %v1801 = vpop.f32.mrf.mxu0
    %1802 = vdwg.mxu0
    %1803 = vmatprep.subr.bf16.mxu0 0
    %1804 = vmatpush1.bf16.msra.mxu0 %v1471
    %1805 = vmatprep.subr.bf16.mxu0 0
    %1806 = vmatpush1.bf16.msra.mxu0 %v1468
    %1807 = vmatprep.subr.bf16.mxu0 0
    %1808 = vmatpush1.bf16.msra.mxu0 %v1465
    %1809 = vmatprep.subr.bf16.mxu0 0
    %1810 = vmatpush1.bf16.msra.mxu0 %v1462
    %1811 = vmatprep.subr.bf16.mxu0 0
    %1812 = vmatpush1.bf16.msra.mxu0 %v1459
    %1813 = vmatprep.subr.bf16.mxu0 0
    %1814 = vmatpush1.bf16.msra.mxu0 %v1456
    %1815 = vmatprep.subr.bf16.mxu0 0
    %1816 = vmatpush1.bf16.msra.mxu0 %v1453
    %1817 = vmatprep.subr.bf16.mxu0 0
    %1818 = vmatpush1.bf16.msra.mxu0 %v1450
    %1819 = vmatprep.subr.bf16.mxu0 0
    %1820 = vmatpush2.bf16.msra.mxu0 %v1495
    %1821 = vmatprep.subr.bf16.mxu0 0
    %1822 = vmatpush2.bf16.msra.mxu0 %v1492
    %1823 = vmatprep.subr.bf16.mxu0 0
    %1824 = vmatpush2.bf16.msra.mxu0 %v1489
    %1825 = vmatprep.subr.bf16.mxu0 0
    %1826 = vmatpush2.bf16.msra.mxu0 %v1486
    %1827 = vmatprep.subr.bf16.mxu0 0
    %1828 = vmatpush2.bf16.msra.mxu0 %v1483
    %1829 = vmatprep.subr.bf16.mxu0 0
    %1830 = vmatpush2.bf16.msra.mxu0 %v1480
    %1831 = vmatprep.subr.bf16.mxu0 0
    %1832 = vmatpush2.bf16.msra.mxu0 %v1477
    %1833 = vmatprep.subr.bf16.mxu0 0
    %1834 = vmatpush2.bf16.msra.mxu0 %v1474
    %1835 = vmatprep.mubr.bf16.mxu0 %v922
    %1836 = vmatmul.mubr.bf16.gmra.mxu0 %v921
    %v1837 = vpop.f32.mrf.mxu0
    %v1838 = vadd.f32 %v1773, %v1837
    %v1839 = vpop.f32.mrf.mxu0
    %v1840 = vpop.f32.mrf.mxu0
    %v1841 = vadd.f32 %v1776, %v1840
    %v1842 = vpop.f32.mrf.mxu0
    %1843 = vmatprep.mubr.bf16.mxu0 %v926
    %1844 = vmatmul.mubr.bf16.gmra.mxu0 %v925
    %v1845 = vpop.f32.mrf.mxu0
    %v1846 = vadd.f32 %v1781, %v1845
    %v1847 = vpop.f32.mrf.mxu0
    %v1848 = vpop.f32.mrf.mxu0
    %v1849 = vadd.f32 %v1784, %v1848
    %v1850 = vpop.f32.mrf.mxu0
    %1851 = vmatprep.mubr.bf16.mxu0 %v930
    %1852 = vmatmul.mubr.bf16.gmra.mxu0 %v929
    %v1853 = vpop.f32.mrf.mxu0
    %v1854 = vadd.f32 %v1789, %v1853
    %v1855 = vpop.f32.mrf.mxu0
    %v1856 = vpop.f32.mrf.mxu0
    %v1857 = vadd.f32 %v1792, %v1856
    %v1858 = vpop.f32.mrf.mxu0
    %1859 = vmatprep.mubr.bf16.mxu0 %v934
    %1860 = vmatmul.mubr.bf16.gmra.mxu0 %v933
    %v1861 = vpop.f32.mrf.mxu0
    %v1862 = vadd.f32 %v1797, %v1861
    %v1863 = vpop.f32.mrf.mxu0
    %v1864 = vpop.f32.mrf.mxu0
    %v1865 = vadd.f32 %v1800, %v1864
    %v1866 = vpop.f32.mrf.mxu0
    %1867 = vdwg.mxu0
    %v1868 = vmax.f32 %v1700, 0.0
    %v1869 = vmax.f32 %v1702, 0.0
    %v1870 = vmax.f32 %v1838, 0.0
    %v1871 = vmax.f32 %v1704, 0.0
    %v1872 = vmax.f32 %v1706, 0.0
    %v1873 = vmax.f32 %v1841, 0.0
    %v1874 = vmax.f32 %v1710, 0.0
    %v1875 = vmax.f32 %v1712, 0.0
    %v1876 = vmax.f32 %v1846, 0.0
    %v1877 = vmax.f32 %v1714, 0.0
    %v1878 = vmax.f32 %v1716, 0.0
    %v1879 = vmax.f32 %v1849, 0.0
    %v1880 = vmax.f32 %v1720, 0.0
    %v1881 = vmax.f32 %v1722, 0.0
    %v1882 = vmax.f32 %v1854, 0.0
    %v1883 = vmax.f32 %v1724, 0.0
    %v1884 = vmax.f32 %v1726, 0.0
    %v1885 = vmax.f32 %v1857, 0.0
    %v1886 = vmax.f32 %v1730, 0.0
    %v1887 = vmax.f32 %v1732, 0.0
    %v1888 = vmax.f32 %v1862, 0.0
    %v1889 = vmax.f32 %v1734, 0.0
    %v1890 = vmax.f32 %v1736, 0.0
    %v1891 = vmax.f32 %v1865, 0.0
    %v1892 = vld [vmem:[#allocation7] sm:$0xff]
    %v1893 = vld [vmem:[#allocation7 + $0x8] sm:$0xff]
    %v1894 = vld [vmem:[#allocation7 + $0x10] sm:$0xff]
    %v1895 = vld [vmem:[#allocation7 + $0x18] sm:$0xff]
    %v1896 = vld [vmem:[#allocation7 + $0x20] sm:$0xff]
    %v1897 = vld [vmem:[#allocation7 + $0x28] sm:$0xff]
    %v1898 = vld [vmem:[#allocation7 + $0x30] sm:$0xff]
    %v1899 = vld [vmem:[#allocation7 + $0x38] sm:$0xff]
    %v1900 = vld [vmem:[#allocation7 + $0x40] sm:$0xff]
    %v1901 = vld [vmem:[#allocation7 + $0x48] sm:$0xff]
    %v1902 = vld [vmem:[#allocation7 + $0x50] sm:$0xff]
    %v1903 = vld [vmem:[#allocation7 + $0x58] sm:$0xff]
    %v1904 = vld [vmem:[#allocation7 + $0x60] sm:$0xff]
    %v1905 = vld [vmem:[#allocation7 + $0x68] sm:$0xff]
    %v1906 = vld [vmem:[#allocation7 + $0x70] sm:$0xff]
    %v1907 = vld [vmem:[#allocation7 + $0x78] sm:$0xff]
    %v1908 = vld [vmem:[#allocation7 + $0x80] sm:$0xff]
    %v1909 = vld [vmem:[#allocation7 + $0x88] sm:$0xff]
    %v1910 = vld [vmem:[#allocation7 + $0x90] sm:$0xff]
    %v1911 = vld [vmem:[#allocation7 + $0x98] sm:$0xff]
    %v1912 = vld [vmem:[#allocation7 + $0xa0] sm:$0xff]
    %v1913 = vld [vmem:[#allocation7 + $0xa8] sm:$0xff]
    %v1914 = vld [vmem:[#allocation7 + $0xb0] sm:$0xff]
    %v1915 = vld [vmem:[#allocation7 + $0xb8] sm:$0xff]
    %v1916 = vld [vmem:[#allocation7 + $0xc0] sm:$0xff]
    %v1917 = vld [vmem:[#allocation7 + $0xc8] sm:$0xff]
    %v1918 = vld [vmem:[#allocation7 + $0xd0] sm:$0xff]
    %v1919 = vld [vmem:[#allocation7 + $0xd8] sm:$0xff]
    %v1920 = vld [vmem:[#allocation7 + $0xe0] sm:$0xff]
    %v1921 = vld [vmem:[#allocation7 + $0xe8] sm:$0xff]
    %v1922 = vld [vmem:[#allocation7 + $0xf0] sm:$0xff]
    %v1923 = vld [vmem:[#allocation7 + $0xf8] sm:$0xff]
    %v1924 = vld [vmem:[#allocation7 + $0x100] sm:$0xff]
    %v1925 = vld [vmem:[#allocation7 + $0x108] sm:$0xff]
    %v1926 = vld [vmem:[#allocation7 + $0x110] sm:$0xff]
    %v1927 = vld [vmem:[#allocation7 + $0x118] sm:$0xff]
    %v1928 = vld [vmem:[#allocation7 + $0x120] sm:$0xff]
    %v1929 = vld [vmem:[#allocation7 + $0x128] sm:$0xff]
    %v1930 = vld [vmem:[#allocation7 + $0x130] sm:$0xff]
    %v1931 = vld [vmem:[#allocation7 + $0x138] sm:$0xff]
    %v1932 = vld [vmem:[#allocation7 + $0x140] sm:$0xff]
    %v1933 = vld [vmem:[#allocation7 + $0x148] sm:$0xff]
    %v1934 = vld [vmem:[#allocation7 + $0x150] sm:$0xff]
    %v1935 = vld [vmem:[#allocation7 + $0x158] sm:$0xff]
    %v1936 = vld [vmem:[#allocation7 + $0x160] sm:$0xff]
    %v1937 = vld [vmem:[#allocation7 + $0x168] sm:$0xff]
    %v1938 = vld [vmem:[#allocation7 + $0x170] sm:$0xff]
    %v1939 = vld [vmem:[#allocation7 + $0x178] sm:$0xff]
    %v1940 = vld [vmem:[%s7] sm:$0x1]
    %v1942 = vlaneseq
    %v1943 = vshrl.u32 %v1942, 7
    %v1944 = vsub.s32 0, %v1943
    %v1945 = vrot.slane %v1940, %v1944
    %1947 = vmatprep.subr.mxu0 0.0
    %1948 = vmatpush1.msra.mxu0 %v1907
    %1949 = vmatprep.subr.mxu0 0.0
    %1950 = vmatpush1.msra.mxu0 %v1906
    %1951 = vmatprep.subr.mxu0 0.0
    %1952 = vmatpush1.msra.mxu0 %v1905
    %1953 = vmatprep.subr.mxu0 0.0
    %1954 = vmatpush1.msra.mxu0 %v1904
    %1955 = vmatprep.subr.mxu0 0.0
    %1956 = vmatpush1.msra.mxu0 %v1903
    %1957 = vmatprep.subr.mxu0 0.0
    %1958 = vmatpush1.msra.mxu0 %v1902
    %1959 = vmatprep.subr.mxu0 0.0
    %1960 = vmatpush1.msra.mxu0 %v1901
    %1961 = vmatprep.subr.mxu0 0.0
    %1962 = vmatpush1.msra.mxu0 %v1900
    %1963 = vmatprep.subr.mxu0 0.0
    %1964 = vmatpush1.msra.mxu0 %v1899
    %1965 = vmatprep.subr.mxu0 0.0
    %1966 = vmatpush1.msra.mxu0 %v1898
    %1967 = vmatprep.subr.mxu0 0.0
    %1968 = vmatpush1.msra.mxu0 %v1897
    %1969 = vmatprep.subr.mxu0 0.0
    %1970 = vmatpush1.msra.mxu0 %v1896
    %1971 = vmatprep.subr.mxu0 0.0
    %1972 = vmatpush1.msra.mxu0 %v1895
    %1973 = vmatprep.subr.mxu0 0.0
    %1974 = vmatpush1.msra.mxu0 %v1894
    %1975 = vmatprep.subr.mxu0 0.0
    %1976 = vmatpush1.msra.mxu0 %v1893
    %1977 = vmatprep.subr.mxu0 0.0
    %1978 = vmatpush1.msra.mxu0 %v1892
    %1979 = vmatprep.subr.mxu0 0.0
    %1980 = vmatpush2.msra.mxu0 %v1923
    %1981 = vmatprep.subr.mxu0 0.0
    %1982 = vmatpush2.msra.mxu0 %v1922
    %1983 = vmatprep.subr.mxu0 0.0
    %1984 = vmatpush2.msra.mxu0 %v1921
    %1985 = vmatprep.subr.mxu0 0.0
    %1986 = vmatpush2.msra.mxu0 %v1920
    %1987 = vmatprep.subr.mxu0 0.0
    %1988 = vmatpush2.msra.mxu0 %v1919
    %1989 = vmatprep.subr.mxu0 0.0
    %1990 = vmatpush2.msra.mxu0 %v1918
    %1991 = vmatprep.subr.mxu0 0.0
    %1992 = vmatpush2.msra.mxu0 %v1917
    %1993 = vmatprep.subr.mxu0 0.0
    %1994 = vmatpush2.msra.mxu0 %v1916
    %1995 = vmatprep.subr.mxu0 0.0
    %1996 = vmatpush2.msra.mxu0 %v1915
    %1997 = vmatprep.subr.mxu0 0.0
    %1998 = vmatpush2.msra.mxu0 %v1914
    %1999 = vmatprep.subr.mxu0 0.0
    %2000 = vmatpush2.msra.mxu0 %v1913
    %2001 = vmatprep.subr.mxu0 0.0
    %2002 = vmatpush2.msra.mxu0 %v1912
    %2003 = vmatprep.subr.mxu0 0.0
    %2004 = vmatpush2.msra.mxu0 %v1911
    %2005 = vmatprep.subr.mxu0 0.0
    %2006 = vmatpush2.msra.mxu0 %v1910
    %2007 = vmatprep.subr.mxu0 0.0
    %2008 = vmatpush2.msra.mxu0 %v1909
    %2009 = vmatprep.subr.mxu0 0.0
    %2010 = vmatpush2.msra.mxu0 %v1908
    %2011 = vmatprep.mubr.f32.mxu0 %v1869
    %2012 = vmatmul.mubr.f32.gmra.mxu0 %v1868
    %v2013 = vpop.f32.mrf.mxu0
    %v2014 = vadd.f32 %v1945, %v2013
    %v2015 = vpop.f32.mrf.mxu0
    %2016 = vmatprep.mubr.f32.mxu0 %v1872
    %2017 = vmatmul.mubr.f32.gmra.mxu0 %v1871
    %v2018 = vpop.f32.mrf.mxu0
    %v2019 = vadd.f32 %v1945, %v2018
    %v2020 = vpop.f32.mrf.mxu0
    %2021 = vmatprep.mubr.f32.mxu0 %v1875
    %2022 = vmatmul.mubr.f32.gmra.mxu0 %v1874
    %v2023 = vpop.f32.mrf.mxu0
    %v2024 = vadd.f32 %v1945, %v2023
    %v2025 = vpop.f32.mrf.mxu0
    %2026 = vmatprep.mubr.f32.mxu0 %v1878
    %2027 = vmatmul.mubr.f32.gmra.mxu0 %v1877
    %v2028 = vpop.f32.mrf.mxu0
    %v2029 = vadd.f32 %v1945, %v2028
    %v2030 = vpop.f32.mrf.mxu0
    %2031 = vmatprep.mubr.f32.mxu0 %v1881
    %2032 = vmatmul.mubr.f32.gmra.mxu0 %v1880
    %v2033 = vpop.f32.mrf.mxu0
    %v2034 = vadd.f32 %v1945, %v2033
    %v2035 = vpop.f32.mrf.mxu0
    %2036 = vmatprep.mubr.f32.mxu0 %v1884
    %2037 = vmatmul.mubr.f32.gmra.mxu0 %v1883
    %v2038 = vpop.f32.mrf.mxu0
    %v2039 = vadd.f32 %v1945, %v2038
    %v2040 = vpop.f32.mrf.mxu0
    %2041 = vmatprep.mubr.f32.mxu0 %v1887
    %2042 = vmatmul.mubr.f32.gmra.mxu0 %v1886
    %v2043 = vpop.f32.mrf.mxu0
    %v2044 = vadd.f32 %v1945, %v2043
    %v2045 = vpop.f32.mrf.mxu0
    %2046 = vmatprep.mubr.f32.mxu0 %v1890
    %2047 = vmatmul.mubr.f32.gmra.mxu0 %v1889
    %v2048 = vpop.f32.mrf.mxu0
    %v2049 = vadd.f32 %v1945, %v2048
    %v2050 = vpop.f32.mrf.mxu0
    %2051 = vdwg.mxu0
    %2052 = vmatprep.subr.mxu0 0.0
    %2053 = vmatpush1.msra.mxu0 %v1939
    %2054 = vmatprep.subr.mxu0 0.0
    %2055 = vmatpush1.msra.mxu0 %v1938
    %2056 = vmatprep.subr.mxu0 0.0
    %2057 = vmatpush1.msra.mxu0 %v1937
    %2058 = vmatprep.subr.mxu0 0.0
    %2059 = vmatpush1.msra.mxu0 %v1936
    %2060 = vmatprep.subr.mxu0 0.0
    %2061 = vmatpush1.msra.mxu0 %v1935
    %2062 = vmatprep.subr.mxu0 0.0
    %2063 = vmatpush1.msra.mxu0 %v1934
    %2064 = vmatprep.subr.mxu0 0.0
    %2065 = vmatpush1.msra.mxu0 %v1933
    %2066 = vmatprep.subr.mxu0 0.0
    %2067 = vmatpush1.msra.mxu0 %v1932
    %2068 = vmatprep.subr.mxu0 0.0
    %2069 = vmatpush1.msra.mxu0 %v1931
    %2070 = vmatprep.subr.mxu0 0.0
    %2071 = vmatpush1.msra.mxu0 %v1930
    %2072 = vmatprep.subr.mxu0 0.0
    %2073 = vmatpush1.msra.mxu0 %v1929
    %2074 = vmatprep.subr.mxu0 0.0
    %2075 = vmatpush1.msra.mxu0 %v1928
    %2076 = vmatprep.subr.mxu0 0.0
    %2077 = vmatpush1.msra.mxu0 %v1927
    %2078 = vmatprep.subr.mxu0 0.0
    %2079 = vmatpush1.msra.mxu0 %v1926
    %2080 = vmatprep.subr.mxu0 0.0
    %2081 = vmatpush1.msra.mxu0 %v1925
    %2082 = vmatprep.subr.mxu0 0.0
    %2083 = vmatpush1.msra.mxu0 %v1924
    %2084 = vmatprep.subr.mxu0 0.0
    %2085 = vmatpush2.msra.mxu0 0.0
    %2086 = vmatprep.subr.mxu0 0.0
    %2087 = vmatpush2.msra.mxu0 0.0
    %2088 = vmatprep.subr.mxu0 0.0
    %2089 = vmatpush2.msra.mxu0 0.0
    %2090 = vmatprep.subr.mxu0 0.0
    %2091 = vmatpush2.msra.mxu0 0.0
    %2092 = vmatprep.subr.mxu0 0.0
    %2093 = vmatpush2.msra.mxu0 0.0
    %2094 = vmatprep.subr.mxu0 0.0
    %2095 = vmatpush2.msra.mxu0 0.0
    %2096 = vmatprep.subr.mxu0 0.0
    %2097 = vmatpush2.msra.mxu0 0.0
    %2098 = vmatprep.subr.mxu0 0.0
    %2099 = vmatpush2.msra.mxu0 0.0
    %2100 = vmatprep.subr.mxu0 0.0
    %2101 = vmatpush2.msra.mxu0 0.0
    %2102 = vmatprep.subr.mxu0 0.0
    %2103 = vmatpush2.msra.mxu0 0.0
    %2104 = vmatprep.subr.mxu0 0.0
    %2105 = vmatpush2.msra.mxu0 0.0
    %2106 = vmatprep.subr.mxu0 0.0
    %2107 = vmatpush2.msra.mxu0 0.0
    %2108 = vmatprep.subr.mxu0 0.0
    %2109 = vmatpush2.msra.mxu0 0.0
    %2110 = vmatprep.subr.mxu0 0.0
    %2111 = vmatpush2.msra.mxu0 0.0
    %2112 = vmatprep.subr.mxu0 0.0
    %2113 = vmatpush2.msra.mxu0 0.0
    %2114 = vmatprep.subr.mxu0 0.0
    %2115 = vmatpush2.msra.mxu0 0.0
    %2116 = vmatprep.mubr.f32.mxu0 0.0
    %2117 = vmatmul.mubr.f32.gmra.mxu0 %v1870
    %v2118 = vpop.f32.mrf.mxu0
    %v2119 = vadd.f32 %v2014, %v2118
    %v2120 = vpop.f32.mrf.mxu0
    %2121 = vmatprep.mubr.f32.mxu0 0.0
    %2122 = vmatmul.mubr.f32.gmra.mxu0 %v1873
    %v2123 = vpop.f32.mrf.mxu0
    %v2124 = vadd.f32 %v2019, %v2123
    %v2125 = vpop.f32.mrf.mxu0
    %2126 = vmatprep.mubr.f32.mxu0 0.0
    %2127 = vmatmul.mubr.f32.gmra.mxu0 %v1876
    %v2128 = vpop.f32.mrf.mxu0
    %v2129 = vadd.f32 %v2024, %v2128
    %v2130 = vpop.f32.mrf.mxu0
    %2131 = vmatprep.mubr.f32.mxu0 0.0
    %2132 = vmatmul.mubr.f32.gmra.mxu0 %v1879
    %v2133 = vpop.f32.mrf.mxu0
    %v2134 = vadd.f32 %v2029, %v2133
    %v2135 = vpop.f32.mrf.mxu0
    %2136 = vmatprep.mubr.f32.mxu0 0.0
    %2137 = vmatmul.mubr.f32.gmra.mxu0 %v1882
    %v2138 = vpop.f32.mrf.mxu0
    %v2139 = vadd.f32 %v2034, %v2138
    %v2140 = vpop.f32.mrf.mxu0
    %2141 = vmatprep.mubr.f32.mxu0 0.0
    %2142 = vmatmul.mubr.f32.gmra.mxu0 %v1885
    %v2143 = vpop.f32.mrf.mxu0
    %v2144 = vadd.f32 %v2039, %v2143
    %v2145 = vpop.f32.mrf.mxu0
    %2146 = vmatprep.mubr.f32.mxu0 0.0
    %2147 = vmatmul.mubr.f32.gmra.mxu0 %v1888
    %v2148 = vpop.f32.mrf.mxu0
    %v2149 = vadd.f32 %v2044, %v2148
    %v2150 = vpop.f32.mrf.mxu0
    %2151 = vmatprep.mubr.f32.mxu0 0.0
    %2152 = vmatmul.mubr.f32.gmra.mxu0 %v1891
    %v2153 = vpop.f32.mrf.mxu0
    %v2154 = vadd.f32 %v2049, %v2153
    %v2155 = vpop.f32.mrf.mxu0
    %2156 = vdwg.mxu0
    %v2157 = vtanh.pop %v2119
    %v2158 = vtanh.pop %v2124
    %v2159 = vtanh.pop %v2129
    %v2160 = vtanh.pop %v2134
    %v2161 = vtanh.pop %v2139
    %v2162 = vtanh.pop %v2144
    %v2163 = vtanh.pop %v2149
    %v2164 = vtanh.pop %v2154
    %2165 = vst [vmem:[#allocation8] sm:$0xff] %v2157
    %2166 = vst [vmem:[#allocation8 + $0x8] sm:$0xff] %v2158
    %2167 = vst [vmem:[#allocation8 + $0x10] sm:$0xff] %v2159
    %2168 = vst [vmem:[#allocation8 + $0x18] sm:$0xff] %v2160
    %2169 = vst [vmem:[#allocation8 + $0x20] sm:$0xff] %v2161
    %2170 = vst [vmem:[#allocation8 + $0x28] sm:$0xff] %v2162
    %2171 = vst [vmem:[#allocation8 + $0x30] sm:$0xff] %v2163
    %2172 = vst [vmem:[#allocation8 + $0x38] sm:$0xff] %v2164
    // Predicated region
    $region46: #{tpu_custom_call.1} parent=1 // pred_check
      _
    $region47: #{tpu_custom_call.1} parent=1 // pred_check_branch
      %2174 = sbr.rel (0) target = $region49
    $region48: #{tpu_custom_call.1} parent=1 // pred_region
      %s2176 = ssub.s32 1024, 1024
      %2177 = vsyncadd [#allocation4], %s2176
      %s2178 = sshll.u32 [#allocation8], 4
      %s2179 = int_to_ptr.vmem [resolvable:$true] %s2178
      %2184 = dma.vmem_to_hbm [thread:$0]  %s2179, 1024, %s8, [#allocation4], 128, 128, 8
    $region49: #{tpu_custom_call.1} parent=1 // pred_fallthru
      _
    // Predicated region
    $region50: #{tpu_custom_call.1} parent=1 // pred_check
      _
    $region51: #{tpu_custom_call.1} parent=1 // pred_check_branch
      %2186 = sbr.rel (0) target = $region53
    $region52: #{tpu_custom_call.1} parent=1 // pred_region
      %2187 = dma.done [#allocation4], 1024
    $region53: #{tpu_custom_call.1} parent=1 // pred_fallthru
      _
    %2188 = vsyncpa [#allocation3], 1
    %2189 = vsyncpa [#allocation6], 1
    %2190 = vsyncpa [#allocation4], 1

</llo_original>
